<compile_context>
chip_gen: v7x
topology: tpu7x:2x2x1
jax: 0.10.0
libtpu: 0.0.40
codegen_flags: <defaults>
</compile_context>

<pallas_src>
import functools
import math

import jax
import jax.numpy as jnp
from jax import lax
from jax.experimental import pallas as pl
from jax.experimental.pallas import tpu as pltpu


# ----------------------------- Pallas kernel -----------------------------

def posterior_encoder_kernel(n_layers, kernel_size, dilation_rate, hidden, out_ch,
                             # scalar prefetch
                             lens_ref,
                             # inputs
                             x_ref, noise_ref,
                             w_pre_ref, b_pre_ref,
                             w_in_ref, b_in_ref,
                             w_rs_ref, b_rs_ref,
                             w_proj_ref, b_proj_ref,
                             # outputs
                             z_ref, m_ref, logs_ref):
    b = pl.program_id(0)
    T = x_ref.shape[1]

    # Sequence mask built in-kernel from the scalar-prefetched lengths.
    t_ids = lax.broadcasted_iota(jnp.int32, (T, 1), 0)
    mask = (t_ids < lens_ref[b]).astype(jnp.float32)                     # (T, 1)

    # pre: Conv1d(in, hidden, 1) == channel matmul; bf16 operands, f32 acc.
    x0 = x_ref[0].astype(jnp.bfloat16)                                   # (T, Cin)
    x = (jnp.dot(x0, w_pre_ref[...], preferred_element_type=jnp.float32)
         + b_pre_ref[...]) * mask                                        # (T, C) f32
    skip = jnp.zeros((T, hidden), jnp.float32)

    half = (kernel_size - 1) // 2
    for i in range(n_layers):                                            # static unroll
        d = dilation_rate ** i
        pad = half * d

        # Zero-padded im2col slab: slab[:, k*C:(k+1)*C] = x[t + (k - half)*d].
        if pad > 0:
            zpad = jnp.zeros((pad, hidden), jnp.float32)
            xp = jnp.concatenate([zpad, x, zpad], axis=0)                # (T + 2*pad, C)
        else:
            xp = x
        slab = jnp.concatenate(
            [xp[k * d:k * d + T, :] for k in range(kernel_size)], axis=-1)  # (T, K*C)

        # in_layers[i]: dilated Conv1d(C, 2C, K) == ONE deep matmul.
        x_in = (jnp.dot(slab.astype(jnp.bfloat16), w_in_ref[i],
                        preferred_element_type=jnp.float32) + b_in_ref[i])  # (T, 2C)

        # fused_add_tanh_sigmoid_multiply (g=None).  Reciprocal -> EUP slot.
        t_act = jnp.tanh(x_in[:, :hidden])
        s_act = pl.reciprocal(1.0 + jnp.exp(-x_in[:, hidden:]), approx=True)
        acts = t_act * s_act                                             # (T, C)

        # res_skip_layers[i]: Conv1d 1x1.  The last layer's C-channel output is
        # packed into the "skip" half of a uniform (C, 2C) weight (res half = 0),
        # which reproduces the PyTorch branch `output += res_skip_acts`.
        rs = (jnp.dot(acts.astype(jnp.bfloat16), w_rs_ref[i],
                      preferred_element_type=jnp.float32) + b_rs_ref[i])    # (T, 2C)
        x = (x + rs[:, :hidden]) * mask
        skip = skip + rs[:, hidden:]

    out = skip * mask                                                    # WN output * mask

    # proj: Conv1d(hidden, 2*out, 1) * mask, split, sample.
    stats = (jnp.dot(out.astype(jnp.bfloat16), w_proj_ref[...],
                     preferred_element_type=jnp.float32) + b_proj_ref[...]) * mask
    m = stats[:, :out_ch]
    logs = stats[:, out_ch:]
    z = (m + noise_ref[0] * jnp.exp(logs)) * mask

    z_ref[0] = z.astype(z_ref.dtype)
    m_ref[0] = m.astype(m_ref.dtype)
    logs_ref[0] = logs.astype(logs_ref.dtype)


# ----------------------------- pallas_call wrapper -----------------------------

def posterior_encoder_forward(params, x_nct, lens, noise, *, kernel_size,
                              dilation_rate, n_layers):
    """x_nct: (B, in_channels, T) like PyTorch NCT; lens: (B,) int32;
    noise: (B, T, out_channels) standard normal (stand-in for torch.randn_like)."""
    assert kernel_size % 2 == 1, "WN 'same' padding assumes odd kernel_size"
    B, Cin, T = x_nct.shape
    C = params['b_pre'].shape[1]
    Cout = params['b_proj'].shape[1] // 2

    x_btc = jnp.transpose(x_nct, (0, 2, 1))                              # (B, T, Cin)

    kern = functools.partial(posterior_encoder_kernel, n_layers, kernel_size,
                             dilation_rate, C, Cout)

    weights = [params['w_pre'], params['b_pre'],
               params['w_in'], params['b_in'],
               params['w_rs'], params['b_rs'],
               params['w_proj'], params['b_proj']]

    def batch_spec(shape):
        return pl.BlockSpec((1,) + tuple(shape[1:]), lambda b, lens_sref: (b, 0, 0))

    def full_spec(shape):
        zeros = (0,) * len(shape)
        return pl.BlockSpec(tuple(shape), lambda b, lens_sref, _z=zeros: _z)

    grid_spec = pltpu.PrefetchScalarGridSpec(
        num_scalar_prefetch=1,
        grid=(B,),
        in_specs=([batch_spec(x_btc.shape), batch_spec(noise.shape)] +
                  [full_spec(w.shape) for w in weights]),
        out_specs=(batch_spec((B, T, Cout)),) * 3,
    )

    z, m, logs = pl.pallas_call(
        kern,
        out_shape=(jax.ShapeDtypeStruct((B, T, Cout), jnp.float32),) * 3,
        grid_spec=grid_spec,
        compiler_params=pltpu.CompilerParams(
            dimension_semantics=("parallel",),
            # explicit scoped-VMEM budget; re-derive / tile T for very large T
            # on v7x (64 MiB physical).
            vmem_limit_bytes=64 * 1024 * 1024),
    )(lens, x_btc, noise, *weights)

    to_nct = lambda a: jnp.transpose(a, (0, 2, 1))                       # back to (B, C, T)
    return to_nct(z), to_nct(m), to_nct(logs)


# ----------------------------- parameters -----------------------------

def init_params(key, in_channels, out_channels, hidden_channels, kernel_size, n_layers):
    """Weights in kernel layout (channels-last matmuls), matmul operands bf16.

    Conversion from PyTorch: Conv1d weight (C_out, C_in, K) -> jax[k, c_in, c_out]
    (then taps stacked to (K*C_in, C_out) for the im2col matmul); weight_norm is
    folded into the effective weight.
    """
    C, K, L = hidden_channels, kernel_size, n_layers
    ks = jax.random.split(key, 8)

    def nrm(k, shape, s=0.02):
        return jax.random.normal(k, shape, jnp.float32) * s

    w_in = nrm(ks[2], (L, K, C, 2 * C)).reshape(L, K * C, 2 * C)         # im2col layout
    w_rs = nrm(ks[4], (L, C, 2 * C))
    b_rs = nrm(ks[5], (L, 1, 2 * C))
    # PyTorch's last res_skip layer has only C output channels (all skip):
    # zero the unused res half of the uniform (C, 2C) layout.
    w_rs = w_rs.at[L - 1, :, :C].set(0.0)
    b_rs = b_rs.at[L - 1, :, :C].set(0.0)

    return {
        'w_pre':  nrm(ks[0], (in_channels, C)).astype(jnp.bfloat16),
        'b_pre':  nrm(ks[1], (1, C)),
        'w_in':   w_in.astype(jnp.bfloat16),
        'b_in':   nrm(ks[3], (L, 1, 2 * C)),
        'w_rs':   w_rs.astype(jnp.bfloat16),
        'b_rs':   b_rs,
        'w_proj': nrm(ks[6], (C, 2 * out_channels)).astype(jnp.bfloat16),
        'b_proj': nrm(ks[7], (1, 2 * out_channels)),
    }


# ----------------------------- pure-JAX reference -----------------------------

def _shift_time(x, s):
    # y[:, t] = x[:, t + s] with zero padding; x is (B, T, C).
    B, T, C = x.shape
    z = jnp.zeros_like(x)
    if s == 0:
        return x
    if s > 0:
        if s >= T:
            return z
        return z.at[:, :T - s].set(x[:, s:])
    s = -s
    if s >= T:
        return z
    return z.at[:, s:].set(x[:, :T - s])


def reference_forward(params, x_nct, lens, noise, *, kernel_size, dilation_rate, n_layers):
    B, Cin, T = x_nct.shape
    C = params['b_pre'].shape[1]
    Cout = params['b_proj'].shape[1] // 2
    f32 = lambda w: w.astype(jnp.float32)

    x = jnp.transpose(x_nct, (0, 2, 1)).astype(jnp.float32)
    mask = (jnp.arange(T)[None, :, None] < lens[:, None, None]).astype(jnp.float32)

    h = (x @ f32(params['w_pre']) + params['b_pre']) * mask
    skip = jnp.zeros((B, T, C), jnp.float32)
    half = (kernel_size - 1) // 2
    for i in range(n_layers):
        d = dilation_rate ** i
        w_in = f32(params['w_in'][i]).reshape(kernel_size, C, 2 * C)
        conv = jnp.zeros((B, T, 2 * C), jnp.float32)
        for k in range(kernel_size):
            conv = conv + _shift_time(h, (k - half) * d) @ w_in[k]
        x_in = conv + params['b_in'][i]
        acts = jnp.tanh(x_in[..., :C]) * jax.nn.sigmoid(x_in[..., C:])
        rs = acts @ f32(params['w_rs'][i]) + params['b_rs'][i]
        h = (h + rs[..., :C]) * mask
        skip = skip + rs[..., C:]
    out = skip * mask
    stats = (out @ f32(params['w_proj']) + params['b_proj']) * mask
    m = stats[..., :Cout]
    logs = stats[..., Cout:]
    z = (m + noise * jnp.exp(logs)) * mask
    t = lambda a: jnp.transpose(a, (0, 2, 1))
    return t(z), t(m), t(logs)


# ----------------------------- main -----------------------------

if __name__ == "__main__":
    # Small shapes consistent with the module (VITS uses K=5, dilation_rate=1).
    in_channels, hidden_channels, out_channels = 32, 64, 32
    kernel_size, dilation_rate, n_layers = 5, 1, 4
    B, T = 2, 16

    key = jax.random.PRNGKey(0)
    kp, kx, kn = jax.random.split(key, 3)
    params = init_params(kp, in_channels, out_channels, hidden_channels,
                         kernel_size, n_layers)

    x = jax.random.normal(kx, (B, in_channels, T), jnp.float32)          # NCT like PyTorch
    lens = jnp.array([T, T - 5], jnp.int32)                              # x_mask lengths
    noise = jax.random.normal(kn, (B, T, out_channels), jnp.float32)     # torch.randn_like(m)

    fwd = jax.jit(functools.partial(posterior_encoder_forward,
                                    kernel_size=kernel_size,
                                    dilation_rate=dilation_rate,
                                    n_layers=n_layers))
    z, m, logs = fwd(params, x, lens, noise)
    jax.block_until_ready((z, m, logs))

    # Correctness check vs a pure-JAX f32 reference (same weights; bf16 operand
    # rounding in the kernel -> loose tolerance).
    z_r, m_r, logs_r = reference_forward(params, x, lens, noise,
                                         kernel_size=kernel_size,
                                         dilation_rate=dilation_rate,
                                         n_layers=n_layers)
    for got, ref in ((z, z_r), (m, m_r), (logs, logs_r)):
        err = float(jnp.max(jnp.abs(got - ref)))
        assert err < 8e-2, f"kernel/reference mismatch: max abs err {err}"

    print("KERNEL_OK")
</pallas_src>

<mosaic_0001>
module attributes {stable_mosaic.version = 11 : i64} {
  func.func @posterior_encoder_kernel(%arg0: i32, %arg1: memref<2xi32, #tpu.memory_space<smem>>, %arg2: memref<1x16x32xf32, #tpu.memory_space<vmem>>, %arg3: memref<1x16x32xf32, #tpu.memory_space<vmem>>, %arg4: memref<32x64xbf16, #tpu.memory_space<vmem>>, %arg5: memref<1x64xf32, #tpu.memory_space<vmem>>, %arg6: memref<4x320x128xbf16, #tpu.memory_space<vmem>>, %arg7: memref<4x1x128xf32, #tpu.memory_space<vmem>>, %arg8: memref<4x64x128xbf16, #tpu.memory_space<vmem>>, %arg9: memref<4x1x128xf32, #tpu.memory_space<vmem>>, %arg10: memref<64x64xbf16, #tpu.memory_space<vmem>>, %arg11: memref<1x64xf32, #tpu.memory_space<vmem>>, %arg12: memref<1x16x32xf32, #tpu.memory_space<vmem>>, %arg13: memref<1x16x32xf32, #tpu.memory_space<vmem>>, %arg14: memref<1x16x32xf32, #tpu.memory_space<vmem>>) attributes {dimension_semantics = [#tpu.dimension_semantics<parallel>], iteration_bounds = array<i64: 2>, scalar_prefetch = 1 : i64, scratch_operands = 0 : i64, tpu.core_type = #tpu.core_type<tc>, window_params = [{transform_indices = @transform_0, window_bounds = array<i64: 1, 16, 32>}, {transform_indices = @transform_1, window_bounds = array<i64: 1, 16, 32>}, {pipeline_mode = #tpu.pipeline_mode<synchronous>, transform_indices = @transform_2, window_bounds = array<i64: 32, 64>}, {pipeline_mode = #tpu.pipeline_mode<synchronous>, transform_indices = @transform_3, window_bounds = array<i64: 1, 64>}, {pipeline_mode = #tpu.pipeline_mode<synchronous>, transform_indices = @transform_4, window_bounds = array<i64: 4, 320, 128>}, {pipeline_mode = #tpu.pipeline_mode<synchronous>, transform_indices = @transform_5, window_bounds = array<i64: 4, 1, 128>}, {pipeline_mode = #tpu.pipeline_mode<synchronous>, transform_indices = @transform_6, window_bounds = array<i64: 4, 64, 128>}, {pipeline_mode = #tpu.pipeline_mode<synchronous>, transform_indices = @transform_7, window_bounds = array<i64: 4, 1, 128>}, {pipeline_mode = #tpu.pipeline_mode<synchronous>, transform_indices = @transform_8, window_bounds = array<i64: 64, 64>}, {pipeline_mode = #tpu.pipeline_mode<synchronous>, transform_indices = @transform_9, window_bounds = array<i64: 1, 64>}, {transform_indices = @transform_10, window_bounds = array<i64: 1, 16, 32>}, {transform_indices = @transform_11, window_bounds = array<i64: 1, 16, 32>}, {transform_indices = @transform_12, window_bounds = array<i64: 1, 16, 32>}]} {
    %0 = tpu.iota {dimensions = array<i32: 0>} : vector<16x1xi32>
    %1 = arith.index_cast %arg0 : i32 to index
    %2 = memref.load %arg1[%1] : memref<2xi32, #tpu.memory_space<smem>>
    %3 = vector.broadcast %2 : i32 to vector<16x1xi32>
    %4 = arith.cmpi slt, %0, %3 : vector<16x1xi32>
    %5 = arith.extui %4 : vector<16x1xi1> to vector<16x1xi32>
    %6 = arith.sitofp %5 : vector<16x1xi32> to vector<16x1xf32>
    %c0 = arith.constant 0 : index
    %c0_0 = arith.constant 0 : index
    %c0_1 = arith.constant 0 : index
    %7 = vector.load %arg2[%c0, %c0_0, %c0_1] : memref<1x16x32xf32, #tpu.memory_space<vmem>>, vector<1x16x32xf32>
    %8 = vector.shape_cast %7 : vector<1x16x32xf32> to vector<16x32xf32>
    %9 = arith.truncf %8 : vector<16x32xf32> to vector<16x32xbf16>
    %c0_2 = arith.constant 0 : index
    %c0_3 = arith.constant 0 : index
    %10 = vector.load %arg4[%c0_2, %c0_3] : memref<32x64xbf16, #tpu.memory_space<vmem>>, vector<32x64xbf16>
    %cst = arith.constant dense<0.000000e+00> : vector<16x64xf32>
    %11 = tpu.matmul %9, %10, %cst {dimension_numbers = #tpu.dot_dimension_numbers<[1], [0], [0], [1], [0, 0, 1, 1], [], []>} : vector<16x32xbf16>, vector<32x64xbf16>, vector<16x64xf32> -> vector<16x64xf32>
    %c0_4 = arith.constant 0 : index
    %c0_5 = arith.constant 0 : index
    %12 = vector.load %arg5[%c0_4, %c0_5] : memref<1x64xf32, #tpu.memory_space<vmem>>, vector<1x64xf32>
    %13 = vector.broadcast %12 : vector<1x64xf32> to vector<16x64xf32>
    %14 = arith.addf %11, %13 : vector<16x64xf32>
    %15 = vector.broadcast %6 : vector<16x1xf32> to vector<16x64xf32>
    %16 = arith.mulf %14, %15 : vector<16x64xf32>
    %cst_6 = arith.constant 0.000000e+00 : f32
    %17 = vector.broadcast %cst_6 : f32 to vector<16x64xf32>
    %cst_7 = arith.constant 0.000000e+00 : f32
    %18 = vector.broadcast %cst_7 : f32 to vector<2x64xf32>
    %19 = tpu.concatenate %18, %16, %18 in 0 : vector<2x64xf32>, vector<16x64xf32>, vector<2x64xf32> -> vector<20x64xf32>
    %20 = vector.extract_strided_slice %19 {offsets = [0, 0], sizes = [16, 64], strides = [1, 1]} : vector<20x64xf32> to vector<16x64xf32>
    %21 = vector.extract_strided_slice %19 {offsets = [1, 0], sizes = [16, 64], strides = [1, 1]} : vector<20x64xf32> to vector<16x64xf32>
    %22 = vector.extract_strided_slice %19 {offsets = [2, 0], sizes = [16, 64], strides = [1, 1]} : vector<20x64xf32> to vector<16x64xf32>
    %23 = vector.extract_strided_slice %19 {offsets = [3, 0], sizes = [16, 64], strides = [1, 1]} : vector<20x64xf32> to vector<16x64xf32>
    %24 = vector.extract_strided_slice %19 {offsets = [4, 0], sizes = [16, 64], strides = [1, 1]} : vector<20x64xf32> to vector<16x64xf32>
    %25 = tpu.concatenate %20, %21, %22, %23, %24 in 1 : vector<16x64xf32>, vector<16x64xf32>, vector<16x64xf32>, vector<16x64xf32>, vector<16x64xf32> -> vector<16x320xf32>
    %26 = arith.truncf %25 : vector<16x320xf32> to vector<16x320xbf16>
    %c0_8 = arith.constant 0 : index
    %c0_9 = arith.constant 0 : index
    %c0_10 = arith.constant 0 : index
    %27 = vector.load %arg6[%c0_8, %c0_9, %c0_10] : memref<4x320x128xbf16, #tpu.memory_space<vmem>>, vector<1x320x128xbf16>
    %28 = vector.shape_cast %27 : vector<1x320x128xbf16> to vector<320x128xbf16>
    %cst_11 = arith.constant dense<0.000000e+00> : vector<16x128xf32>
    %29 = tpu.matmul %26, %28, %cst_11 {dimension_numbers = #tpu.dot_dimension_numbers<[1], [0], [0], [1], [0, 0, 1, 1], [], []>} : vector<16x320xbf16>, vector<320x128xbf16>, vector<16x128xf32> -> vector<16x128xf32>
    %c0_12 = arith.constant 0 : index
    %c0_13 = arith.constant 0 : index
    %c0_14 = arith.constant 0 : index
    %30 = vector.load %arg7[%c0_12, %c0_13, %c0_14] : memref<4x1x128xf32, #tpu.memory_space<vmem>>, vector<1x1x128xf32>
    %31 = vector.shape_cast %30 : vector<1x1x128xf32> to vector<1x128xf32>
    %32 = vector.broadcast %31 : vector<1x128xf32> to vector<16x128xf32>
    %33 = arith.addf %29, %32 : vector<16x128xf32>
    %34 = vector.extract_strided_slice %33 {offsets = [0, 0], sizes = [16, 64], strides = [1, 1]} : vector<16x128xf32> to vector<16x64xf32>
    %35 = math.tanh %34 : vector<16x64xf32>
    %36 = vector.extract_strided_slice %33 {offsets = [0, 64], sizes = [16, 64], strides = [1, 1]} : vector<16x128xf32> to vector<16x64xf32>
    %cst_15 = arith.constant 0.000000e+00 : f32
    %37 = vector.broadcast %cst_15 : f32 to vector<16x64xf32>
    %38 = arith.subf %37, %36 : vector<16x64xf32>
    %39 = math.exp %38 : vector<16x64xf32>
    %cst_16 = arith.constant 1.000000e+00 : f32
    %40 = vector.broadcast %cst_16 : f32 to vector<16x64xf32>
    %41 = arith.addf %40, %39 : vector<16x64xf32>
    %42 = tpu.reciprocal %41 {approx = true} : vector<16x64xf32> -> vector<16x64xf32>
    %43 = arith.mulf %35, %42 : vector<16x64xf32>
    %44 = arith.truncf %43 : vector<16x64xf32> to vector<16x64xbf16>
    %c0_17 = arith.constant 0 : index
    %c0_18 = arith.constant 0 : index
    %c0_19 = arith.constant 0 : index
    %45 = vector.load %arg8[%c0_17, %c0_18, %c0_19] : memref<4x64x128xbf16, #tpu.memory_space<vmem>>, vector<1x64x128xbf16>
    %46 = vector.shape_cast %45 : vector<1x64x128xbf16> to vector<64x128xbf16>
    %cst_20 = arith.constant dense<0.000000e+00> : vector<16x128xf32>
    %47 = tpu.matmul %44, %46, %cst_20 {dimension_numbers = #tpu.dot_dimension_numbers<[1], [0], [0], [1], [0, 0, 1, 1], [], []>} : vector<16x64xbf16>, vector<64x128xbf16>, vector<16x128xf32> -> vector<16x128xf32>
    %c0_21 = arith.constant 0 : index
    %c0_22 = arith.constant 0 : index
    %c0_23 = arith.constant 0 : index
    %48 = vector.load %arg9[%c0_21, %c0_22, %c0_23] : memref<4x1x128xf32, #tpu.memory_space<vmem>>, vector<1x1x128xf32>
    %49 = vector.shape_cast %48 : vector<1x1x128xf32> to vector<1x128xf32>
    %50 = vector.broadcast %49 : vector<1x128xf32> to vector<16x128xf32>
    %51 = arith.addf %47, %50 : vector<16x128xf32>
    %52 = vector.extract_strided_slice %51 {offsets = [0, 0], sizes = [16, 64], strides = [1, 1]} : vector<16x128xf32> to vector<16x64xf32>
    %53 = arith.addf %16, %52 : vector<16x64xf32>
    %54 = vector.broadcast %6 : vector<16x1xf32> to vector<16x64xf32>
    %55 = arith.mulf %53, %54 : vector<16x64xf32>
    %56 = vector.extract_strided_slice %51 {offsets = [0, 64], sizes = [16, 64], strides = [1, 1]} : vector<16x128xf32> to vector<16x64xf32>
    %57 = arith.addf %17, %56 : vector<16x64xf32>
    %cst_24 = arith.constant 0.000000e+00 : f32
    %58 = vector.broadcast %cst_24 : f32 to vector<2x64xf32>
    %59 = tpu.concatenate %58, %55, %58 in 0 : vector<2x64xf32>, vector<16x64xf32>, vector<2x64xf32> -> vector<20x64xf32>
    %60 = vector.extract_strided_slice %59 {offsets = [0, 0], sizes = [16, 64], strides = [1, 1]} : vector<20x64xf32> to vector<16x64xf32>
    %61 = vector.extract_strided_slice %59 {offsets = [1, 0], sizes = [16, 64], strides = [1, 1]} : vector<20x64xf32> to vector<16x64xf32>
    %62 = vector.extract_strided_slice %59 {offsets = [2, 0], sizes = [16, 64], strides = [1, 1]} : vector<20x64xf32> to vector<16x64xf32>
    %63 = vector.extract_strided_slice %59 {offsets = [3, 0], sizes = [16, 64], strides = [1, 1]} : vector<20x64xf32> to vector<16x64xf32>
    %64 = vector.extract_strided_slice %59 {offsets = [4, 0], sizes = [16, 64], strides = [1, 1]} : vector<20x64xf32> to vector<16x64xf32>
    %65 = tpu.concatenate %60, %61, %62, %63, %64 in 1 : vector<16x64xf32>, vector<16x64xf32>, vector<16x64xf32>, vector<16x64xf32>, vector<16x64xf32> -> vector<16x320xf32>
    %66 = arith.truncf %65 : vector<16x320xf32> to vector<16x320xbf16>
    %c1 = arith.constant 1 : index
    %c0_25 = arith.constant 0 : index
    %c0_26 = arith.constant 0 : index
    %67 = vector.load %arg6[%c1, %c0_25, %c0_26] : memref<4x320x128xbf16, #tpu.memory_space<vmem>>, vector<1x320x128xbf16>
    %68 = vector.shape_cast %67 : vector<1x320x128xbf16> to vector<320x128xbf16>
    %cst_27 = arith.constant dense<0.000000e+00> : vector<16x128xf32>
    %69 = tpu.matmul %66, %68, %cst_27 {dimension_numbers = #tpu.dot_dimension_numbers<[1], [0], [0], [1], [0, 0, 1, 1], [], []>} : vector<16x320xbf16>, vector<320x128xbf16>, vector<16x128xf32> -> vector<16x128xf32>
    %c1_28 = arith.constant 1 : index
    %c0_29 = arith.constant 0 : index
    %c0_30 = arith.constant 0 : index
    %70 = vector.load %arg7[%c1_28, %c0_29, %c0_30] : memref<4x1x128xf32, #tpu.memory_space<vmem>>, vector<1x1x128xf32>
    %71 = vector.shape_cast %70 : vector<1x1x128xf32> to vector<1x128xf32>
    %72 = vector.broadcast %71 : vector<1x128xf32> to vector<16x128xf32>
    %73 = arith.addf %69, %72 : vector<16x128xf32>
    %74 = vector.extract_strided_slice %73 {offsets = [0, 0], sizes = [16, 64], strides = [1, 1]} : vector<16x128xf32> to vector<16x64xf32>
    %75 = math.tanh %74 : vector<16x64xf32>
    %76 = vector.extract_strided_slice %73 {offsets = [0, 64], sizes = [16, 64], strides = [1, 1]} : vector<16x128xf32> to vector<16x64xf32>
    %cst_31 = arith.constant 0.000000e+00 : f32
    %77 = vector.broadcast %cst_31 : f32 to vector<16x64xf32>
    %78 = arith.subf %77, %76 : vector<16x64xf32>
    %79 = math.exp %78 : vector<16x64xf32>
    %cst_32 = arith.constant 1.000000e+00 : f32
    %80 = vector.broadcast %cst_32 : f32 to vector<16x64xf32>
    %81 = arith.addf %80, %79 : vector<16x64xf32>
    %82 = tpu.reciprocal %81 {approx = true} : vector<16x64xf32> -> vector<16x64xf32>
    %83 = arith.mulf %75, %82 : vector<16x64xf32>
    %84 = arith.truncf %83 : vector<16x64xf32> to vector<16x64xbf16>
    %c1_33 = arith.constant 1 : index
    %c0_34 = arith.constant 0 : index
    %c0_35 = arith.constant 0 : index
    %85 = vector.load %arg8[%c1_33, %c0_34, %c0_35] : memref<4x64x128xbf16, #tpu.memory_space<vmem>>, vector<1x64x128xbf16>
    %86 = vector.shape_cast %85 : vector<1x64x128xbf16> to vector<64x128xbf16>
    %cst_36 = arith.constant dense<0.000000e+00> : vector<16x128xf32>
    %87 = tpu.matmul %84, %86, %cst_36 {dimension_numbers = #tpu.dot_dimension_numbers<[1], [0], [0], [1], [0, 0, 1, 1], [], []>} : vector<16x64xbf16>, vector<64x128xbf16>, vector<16x128xf32> -> vector<16x128xf32>
    %c1_37 = arith.constant 1 : index
    %c0_38 = arith.constant 0 : index
    %c0_39 = arith.constant 0 : index
    %88 = vector.load %arg9[%c1_37, %c0_38, %c0_39] : memref<4x1x128xf32, #tpu.memory_space<vmem>>, vector<1x1x128xf32>
    %89 = vector.shape_cast %88 : vector<1x1x128xf32> to vector<1x128xf32>
    %90 = vector.broadcast %89 : vector<1x128xf32> to vector<16x128xf32>
    %91 = arith.addf %87, %90 : vector<16x128xf32>
    %92 = vector.extract_strided_slice %91 {offsets = [0, 0], sizes = [16, 64], strides = [1, 1]} : vector<16x128xf32> to vector<16x64xf32>
    %93 = arith.addf %55, %92 : vector<16x64xf32>
    %94 = vector.broadcast %6 : vector<16x1xf32> to vector<16x64xf32>
    %95 = arith.mulf %93, %94 : vector<16x64xf32>
    %96 = vector.extract_strided_slice %91 {offsets = [0, 64], sizes = [16, 64], strides = [1, 1]} : vector<16x128xf32> to vector<16x64xf32>
    %97 = arith.addf %57, %96 : vector<16x64xf32>
    %cst_40 = arith.constant 0.000000e+00 : f32
    %98 = vector.broadcast %cst_40 : f32 to vector<2x64xf32>
    %99 = tpu.concatenate %98, %95, %98 in 0 : vector<2x64xf32>, vector<16x64xf32>, vector<2x64xf32> -> vector<20x64xf32>
    %100 = vector.extract_strided_slice %99 {offsets = [0, 0], sizes = [16, 64], strides = [1, 1]} : vector<20x64xf32> to vector<16x64xf32>
    %101 = vector.extract_strided_slice %99 {offsets = [1, 0], sizes = [16, 64], strides = [1, 1]} : vector<20x64xf32> to vector<16x64xf32>
    %102 = vector.extract_strided_slice %99 {offsets = [2, 0], sizes = [16, 64], strides = [1, 1]} : vector<20x64xf32> to vector<16x64xf32>
    %103 = vector.extract_strided_slice %99 {offsets = [3, 0], sizes = [16, 64], strides = [1, 1]} : vector<20x64xf32> to vector<16x64xf32>
    %104 = vector.extract_strided_slice %99 {offsets = [4, 0], sizes = [16, 64], strides = [1, 1]} : vector<20x64xf32> to vector<16x64xf32>
    %105 = tpu.concatenate %100, %101, %102, %103, %104 in 1 : vector<16x64xf32>, vector<16x64xf32>, vector<16x64xf32>, vector<16x64xf32>, vector<16x64xf32> -> vector<16x320xf32>
    %106 = arith.truncf %105 : vector<16x320xf32> to vector<16x320xbf16>
    %c2 = arith.constant 2 : index
    %c0_41 = arith.constant 0 : index
    %c0_42 = arith.constant 0 : index
    %107 = vector.load %arg6[%c2, %c0_41, %c0_42] : memref<4x320x128xbf16, #tpu.memory_space<vmem>>, vector<1x320x128xbf16>
    %108 = vector.shape_cast %107 : vector<1x320x128xbf16> to vector<320x128xbf16>
    %cst_43 = arith.constant dense<0.000000e+00> : vector<16x128xf32>
    %109 = tpu.matmul %106, %108, %cst_43 {dimension_numbers = #tpu.dot_dimension_numbers<[1], [0], [0], [1], [0, 0, 1, 1], [], []>} : vector<16x320xbf16>, vector<320x128xbf16>, vector<16x128xf32> -> vector<16x128xf32>
    %c2_44 = arith.constant 2 : index
    %c0_45 = arith.constant 0 : index
    %c0_46 = arith.constant 0 : index
    %110 = vector.load %arg7[%c2_44, %c0_45, %c0_46] : memref<4x1x128xf32, #tpu.memory_space<vmem>>, vector<1x1x128xf32>
    %111 = vector.shape_cast %110 : vector<1x1x128xf32> to vector<1x128xf32>
    %112 = vector.broadcast %111 : vector<1x128xf32> to vector<16x128xf32>
    %113 = arith.addf %109, %112 : vector<16x128xf32>
    %114 = vector.extract_strided_slice %113 {offsets = [0, 0], sizes = [16, 64], strides = [1, 1]} : vector<16x128xf32> to vector<16x64xf32>
    %115 = math.tanh %114 : vector<16x64xf32>
    %116 = vector.extract_strided_slice %113 {offsets = [0, 64], sizes = [16, 64], strides = [1, 1]} : vector<16x128xf32> to vector<16x64xf32>
    %cst_47 = arith.constant 0.000000e+00 : f32
    %117 = vector.broadcast %cst_47 : f32 to vector<16x64xf32>
    %118 = arith.subf %117, %116 : vector<16x64xf32>
    %119 = math.exp %118 : vector<16x64xf32>
    %cst_48 = arith.constant 1.000000e+00 : f32
    %120 = vector.broadcast %cst_48 : f32 to vector<16x64xf32>
    %121 = arith.addf %120, %119 : vector<16x64xf32>
    %122 = tpu.reciprocal %121 {approx = true} : vector<16x64xf32> -> vector<16x64xf32>
    %123 = arith.mulf %115, %122 : vector<16x64xf32>
    %124 = arith.truncf %123 : vector<16x64xf32> to vector<16x64xbf16>
    %c2_49 = arith.constant 2 : index
    %c0_50 = arith.constant 0 : index
    %c0_51 = arith.constant 0 : index
    %125 = vector.load %arg8[%c2_49, %c0_50, %c0_51] : memref<4x64x128xbf16, #tpu.memory_space<vmem>>, vector<1x64x128xbf16>
    %126 = vector.shape_cast %125 : vector<1x64x128xbf16> to vector<64x128xbf16>
    %cst_52 = arith.constant dense<0.000000e+00> : vector<16x128xf32>
    %127 = tpu.matmul %124, %126, %cst_52 {dimension_numbers = #tpu.dot_dimension_numbers<[1], [0], [0], [1], [0, 0, 1, 1], [], []>} : vector<16x64xbf16>, vector<64x128xbf16>, vector<16x128xf32> -> vector<16x128xf32>
    %c2_53 = arith.constant 2 : index
    %c0_54 = arith.constant 0 : index
    %c0_55 = arith.constant 0 : index
    %128 = vector.load %arg9[%c2_53, %c0_54, %c0_55] : memref<4x1x128xf32, #tpu.memory_space<vmem>>, vector<1x1x128xf32>
    %129 = vector.shape_cast %128 : vector<1x1x128xf32> to vector<1x128xf32>
    %130 = vector.broadcast %129 : vector<1x128xf32> to vector<16x128xf32>
    %131 = arith.addf %127, %130 : vector<16x128xf32>
    %132 = vector.extract_strided_slice %131 {offsets = [0, 0], sizes = [16, 64], strides = [1, 1]} : vector<16x128xf32> to vector<16x64xf32>
    %133 = arith.addf %95, %132 : vector<16x64xf32>
    %134 = vector.broadcast %6 : vector<16x1xf32> to vector<16x64xf32>
    %135 = arith.mulf %133, %134 : vector<16x64xf32>
    %136 = vector.extract_strided_slice %131 {offsets = [0, 64], sizes = [16, 64], strides = [1, 1]} : vector<16x128xf32> to vector<16x64xf32>
    %137 = arith.addf %97, %136 : vector<16x64xf32>
    %cst_56 = arith.constant 0.000000e+00 : f32
    %138 = vector.broadcast %cst_56 : f32 to vector<2x64xf32>
    %139 = tpu.concatenate %138, %135, %138 in 0 : vector<2x64xf32>, vector<16x64xf32>, vector<2x64xf32> -> vector<20x64xf32>
    %140 = vector.extract_strided_slice %139 {offsets = [0, 0], sizes = [16, 64], strides = [1, 1]} : vector<20x64xf32> to vector<16x64xf32>
    %141 = vector.extract_strided_slice %139 {offsets = [1, 0], sizes = [16, 64], strides = [1, 1]} : vector<20x64xf32> to vector<16x64xf32>
    %142 = vector.extract_strided_slice %139 {offsets = [2, 0], sizes = [16, 64], strides = [1, 1]} : vector<20x64xf32> to vector<16x64xf32>
    %143 = vector.extract_strided_slice %139 {offsets = [3, 0], sizes = [16, 64], strides = [1, 1]} : vector<20x64xf32> to vector<16x64xf32>
    %144 = vector.extract_strided_slice %139 {offsets = [4, 0], sizes = [16, 64], strides = [1, 1]} : vector<20x64xf32> to vector<16x64xf32>
    %145 = tpu.concatenate %140, %141, %142, %143, %144 in 1 : vector<16x64xf32>, vector<16x64xf32>, vector<16x64xf32>, vector<16x64xf32>, vector<16x64xf32> -> vector<16x320xf32>
    %146 = arith.truncf %145 : vector<16x320xf32> to vector<16x320xbf16>
    %c3 = arith.constant 3 : index
    %c0_57 = arith.constant 0 : index
    %c0_58 = arith.constant 0 : index
    %147 = vector.load %arg6[%c3, %c0_57, %c0_58] : memref<4x320x128xbf16, #tpu.memory_space<vmem>>, vector<1x320x128xbf16>
    %148 = vector.shape_cast %147 : vector<1x320x128xbf16> to vector<320x128xbf16>
    %cst_59 = arith.constant dense<0.000000e+00> : vector<16x128xf32>
    %149 = tpu.matmul %146, %148, %cst_59 {dimension_numbers = #tpu.dot_dimension_numbers<[1], [0], [0], [1], [0, 0, 1, 1], [], []>} : vector<16x320xbf16>, vector<320x128xbf16>, vector<16x128xf32> -> vector<16x128xf32>
    %c3_60 = arith.constant 3 : index
    %c0_61 = arith.constant 0 : index
    %c0_62 = arith.constant 0 : index
    %150 = vector.load %arg7[%c3_60, %c0_61, %c0_62] : memref<4x1x128xf32, #tpu.memory_space<vmem>>, vector<1x1x128xf32>
    %151 = vector.shape_cast %150 : vector<1x1x128xf32> to vector<1x128xf32>
    %152 = vector.broadcast %151 : vector<1x128xf32> to vector<16x128xf32>
    %153 = arith.addf %149, %152 : vector<16x128xf32>
    %154 = vector.extract_strided_slice %153 {offsets = [0, 0], sizes = [16, 64], strides = [1, 1]} : vector<16x128xf32> to vector<16x64xf32>
    %155 = math.tanh %154 : vector<16x64xf32>
    %156 = vector.extract_strided_slice %153 {offsets = [0, 64], sizes = [16, 64], strides = [1, 1]} : vector<16x128xf32> to vector<16x64xf32>
    %cst_63 = arith.constant 0.000000e+00 : f32
    %157 = vector.broadcast %cst_63 : f32 to vector<16x64xf32>
    %158 = arith.subf %157, %156 : vector<16x64xf32>
    %159 = math.exp %158 : vector<16x64xf32>
    %cst_64 = arith.constant 1.000000e+00 : f32
    %160 = vector.broadcast %cst_64 : f32 to vector<16x64xf32>
    %161 = arith.addf %160, %159 : vector<16x64xf32>
    %162 = tpu.reciprocal %161 {approx = true} : vector<16x64xf32> -> vector<16x64xf32>
    %163 = arith.mulf %155, %162 : vector<16x64xf32>
    %164 = arith.truncf %163 : vector<16x64xf32> to vector<16x64xbf16>
    %c3_65 = arith.constant 3 : index
    %c0_66 = arith.constant 0 : index
    %c0_67 = arith.constant 0 : index
    %165 = vector.load %arg8[%c3_65, %c0_66, %c0_67] : memref<4x64x128xbf16, #tpu.memory_space<vmem>>, vector<1x64x128xbf16>
    %166 = vector.shape_cast %165 : vector<1x64x128xbf16> to vector<64x128xbf16>
    %cst_68 = arith.constant dense<0.000000e+00> : vector<16x128xf32>
    %167 = tpu.matmul %164, %166, %cst_68 {dimension_numbers = #tpu.dot_dimension_numbers<[1], [0], [0], [1], [0, 0, 1, 1], [], []>} : vector<16x64xbf16>, vector<64x128xbf16>, vector<16x128xf32> -> vector<16x128xf32>
    %c3_69 = arith.constant 3 : index
    %c0_70 = arith.constant 0 : index
    %c0_71 = arith.constant 0 : index
    %168 = vector.load %arg9[%c3_69, %c0_70, %c0_71] : memref<4x1x128xf32, #tpu.memory_space<vmem>>, vector<1x1x128xf32>
    %169 = vector.shape_cast %168 : vector<1x1x128xf32> to vector<1x128xf32>
    %170 = vector.broadcast %169 : vector<1x128xf32> to vector<16x128xf32>
    %171 = arith.addf %167, %170 : vector<16x128xf32>
    %172 = vector.extract_strided_slice %171 {offsets = [0, 64], sizes = [16, 64], strides = [1, 1]} : vector<16x128xf32> to vector<16x64xf32>
    %173 = arith.addf %137, %172 : vector<16x64xf32>
    %174 = vector.broadcast %6 : vector<16x1xf32> to vector<16x64xf32>
    %175 = arith.mulf %173, %174 : vector<16x64xf32>
    %176 = arith.truncf %175 : vector<16x64xf32> to vector<16x64xbf16>
    %c0_72 = arith.constant 0 : index
    %c0_73 = arith.constant 0 : index
    %177 = vector.load %arg10[%c0_72, %c0_73] : memref<64x64xbf16, #tpu.memory_space<vmem>>, vector<64x64xbf16>
    %cst_74 = arith.constant dense<0.000000e+00> : vector<16x64xf32>
    %178 = tpu.matmul %176, %177, %cst_74 {dimension_numbers = #tpu.dot_dimension_numbers<[1], [0], [0], [1], [0, 0, 1, 1], [], []>} : vector<16x64xbf16>, vector<64x64xbf16>, vector<16x64xf32> -> vector<16x64xf32>
    %c0_75 = arith.constant 0 : index
    %c0_76 = arith.constant 0 : index
    %179 = vector.load %arg11[%c0_75, %c0_76] : memref<1x64xf32, #tpu.memory_space<vmem>>, vector<1x64xf32>
    %180 = vector.broadcast %179 : vector<1x64xf32> to vector<16x64xf32>
    %181 = arith.addf %178, %180 : vector<16x64xf32>
    %182 = vector.broadcast %6 : vector<16x1xf32> to vector<16x64xf32>
    %183 = arith.mulf %181, %182 : vector<16x64xf32>
    %184 = vector.extract_strided_slice %183 {offsets = [0, 0], sizes = [16, 32], strides = [1, 1]} : vector<16x64xf32> to vector<16x32xf32>
    %185 = vector.extract_strided_slice %183 {offsets = [0, 32], sizes = [16, 32], strides = [1, 1]} : vector<16x64xf32> to vector<16x32xf32>
    %c0_77 = arith.constant 0 : index
    %c0_78 = arith.constant 0 : index
    %c0_79 = arith.constant 0 : index
    %186 = vector.load %arg3[%c0_77, %c0_78, %c0_79] : memref<1x16x32xf32, #tpu.memory_space<vmem>>, vector<1x16x32xf32>
    %187 = vector.shape_cast %186 : vector<1x16x32xf32> to vector<16x32xf32>
    %188 = math.exp %185 : vector<16x32xf32>
    %189 = arith.mulf %187, %188 : vector<16x32xf32>
    %190 = arith.addf %184, %189 : vector<16x32xf32>
    %191 = vector.broadcast %6 : vector<16x1xf32> to vector<16x32xf32>
    %192 = arith.mulf %190, %191 : vector<16x32xf32>
    %c0_80 = arith.constant 0 : index
    %c0_81 = arith.constant 0 : index
    %c0_82 = arith.constant 0 : index
    %193 = vector.load %arg12[%c0_80, %c0_81, %c0_82] : memref<1x16x32xf32, #tpu.memory_space<vmem>>, vector<1x16x32xf32>
    %194 = vector.shape_cast %193 : vector<1x16x32xf32> to vector<16x32xf32>
    %195 = vector.shape_cast %192 : vector<16x32xf32> to vector<1x16x32xf32>
    tpu.vector_store %arg12[%c0_80, %c0_81, %c0_82], %195 {strides = array<i32>} : memref<1x16x32xf32, #tpu.memory_space<vmem>>, vector<1x16x32xf32>,
    %c0_83 = arith.constant 0 : index
    %c0_84 = arith.constant 0 : index
    %c0_85 = arith.constant 0 : index
    %196 = vector.load %arg13[%c0_83, %c0_84, %c0_85] : memref<1x16x32xf32, #tpu.memory_space<vmem>>, vector<1x16x32xf32>
    %197 = vector.shape_cast %196 : vector<1x16x32xf32> to vector<16x32xf32>
    %198 = vector.shape_cast %184 : vector<16x32xf32> to vector<1x16x32xf32>
    tpu.vector_store %arg13[%c0_83, %c0_84, %c0_85], %198 {strides = array<i32>} : memref<1x16x32xf32, #tpu.memory_space<vmem>>, vector<1x16x32xf32>,
    %c0_86 = arith.constant 0 : index
    %c0_87 = arith.constant 0 : index
    %c0_88 = arith.constant 0 : index
    %199 = vector.load %arg14[%c0_86, %c0_87, %c0_88] : memref<1x16x32xf32, #tpu.memory_space<vmem>>, vector<1x16x32xf32>
    %200 = vector.shape_cast %199 : vector<1x16x32xf32> to vector<16x32xf32>
    %201 = vector.shape_cast %185 : vector<16x32xf32> to vector<1x16x32xf32>
    tpu.vector_store %arg14[%c0_86, %c0_87, %c0_88], %201 {strides = array<i32>} : memref<1x16x32xf32, #tpu.memory_space<vmem>>, vector<1x16x32xf32>,
    return
  }
  func.func @transform_0(%arg0: i32, %arg1: memref<2xi32, #tpu.memory_space<smem>>) -> (i32, i32, i32) {
    %c0_i32 = arith.constant 0 : i32
    %c0_i32_0 = arith.constant 0 : i32
    %c0_i32_1 = arith.constant 0 : i32
    return %arg0, %c0_i32, %c0_i32_0 : i32, i32, i32
  }
  func.func @transform_1(%arg0: i32, %arg1: memref<2xi32, #tpu.memory_space<smem>>) -> (i32, i32, i32) {
    %c0_i32 = arith.constant 0 : i32
    %c0_i32_0 = arith.constant 0 : i32
    %c0_i32_1 = arith.constant 0 : i32
    return %arg0, %c0_i32, %c0_i32_0 : i32, i32, i32
  }
  func.func @transform_2(%arg0: i32, %arg1: memref<2xi32, #tpu.memory_space<smem>>) -> (i32, i32) {
    %c0_i32 = arith.constant 0 : i32
    %c0_i32_0 = arith.constant 0 : i32
    %c0_i32_1 = arith.constant 0 : i32
    return %c0_i32, %c0_i32_0 : i32, i32
  }
  func.func @transform_3(%arg0: i32, %arg1: memref<2xi32, #tpu.memory_space<smem>>) -> (i32, i32) {
    %c0_i32 = arith.constant 0 : i32
    %c0_i32_0 = arith.constant 0 : i32
    %c0_i32_1 = arith.constant 0 : i32
    return %c0_i32, %c0_i32_0 : i32, i32
  }
  func.func @transform_4(%arg0: i32, %arg1: memref<2xi32, #tpu.memory_space<smem>>) -> (i32, i32, i32) {
    %c0_i32 = arith.constant 0 : i32
    %c0_i32_0 = arith.constant 0 : i32
    %c0_i32_1 = arith.constant 0 : i32
    %c0_i32_2 = arith.constant 0 : i32
    return %c0_i32, %c0_i32_0, %c0_i32_1 : i32, i32, i32
  }
  func.func @transform_5(%arg0: i32, %arg1: memref<2xi32, #tpu.memory_space<smem>>) -> (i32, i32, i32) {
    %c0_i32 = arith.constant 0 : i32
    %c0_i32_0 = arith.constant 0 : i32
    %c0_i32_1 = arith.constant 0 : i32
    %c0_i32_2 = arith.constant 0 : i32
    return %c0_i32, %c0_i32_0, %c0_i32_1 : i32, i32, i32
  }
  func.func @transform_6(%arg0: i32, %arg1: memref<2xi32, #tpu.memory_space<smem>>) -> (i32, i32, i32) {
    %c0_i32 = arith.constant 0 : i32
    %c0_i32_0 = arith.constant 0 : i32
    %c0_i32_1 = arith.constant 0 : i32
    %c0_i32_2 = arith.constant 0 : i32
    return %c0_i32, %c0_i32_0, %c0_i32_1 : i32, i32, i32
  }
  func.func @transform_7(%arg0: i32, %arg1: memref<2xi32, #tpu.memory_space<smem>>) -> (i32, i32, i32) {
    %c0_i32 = arith.constant 0 : i32
    %c0_i32_0 = arith.constant 0 : i32
    %c0_i32_1 = arith.constant 0 : i32
    %c0_i32_2 = arith.constant 0 : i32
    return %c0_i32, %c0_i32_0, %c0_i32_1 : i32, i32, i32
  }
  func.func @transform_8(%arg0: i32, %arg1: memref<2xi32, #tpu.memory_space<smem>>) -> (i32, i32) {
    %c0_i32 = arith.constant 0 : i32
    %c0_i32_0 = arith.constant 0 : i32
    %c0_i32_1 = arith.constant 0 : i32
    return %c0_i32, %c0_i32_0 : i32, i32
  }
  func.func @transform_9(%arg0: i32, %arg1: memref<2xi32, #tpu.memory_space<smem>>) -> (i32, i32) {
    %c0_i32 = arith.constant 0 : i32
    %c0_i32_0 = arith.constant 0 : i32
    %c0_i32_1 = arith.constant 0 : i32
    return %c0_i32, %c0_i32_0 : i32, i32
  }
  func.func @transform_10(%arg0: i32, %arg1: memref<2xi32, #tpu.memory_space<smem>>) -> (i32, i32, i32) {
    %c0_i32 = arith.constant 0 : i32
    %c0_i32_0 = arith.constant 0 : i32
    %c0_i32_1 = arith.constant 0 : i32
    return %arg0, %c0_i32, %c0_i32_0 : i32, i32, i32
  }
  func.func @transform_11(%arg0: i32, %arg1: memref<2xi32, #tpu.memory_space<smem>>) -> (i32, i32, i32) {
    %c0_i32 = arith.constant 0 : i32
    %c0_i32_0 = arith.constant 0 : i32
    %c0_i32_1 = arith.constant 0 : i32
    return %arg0, %c0_i32, %c0_i32_0 : i32, i32, i32
  }
  func.func @transform_12(%arg0: i32, %arg1: memref<2xi32, #tpu.memory_space<smem>>) -> (i32, i32, i32) {
    %c0_i32 = arith.constant 0 : i32
    %c0_i32_0 = arith.constant 0 : i32
    %c0_i32_1 = arith.constant 0 : i32
    return %arg0, %c0_i32, %c0_i32_0 : i32, i32, i32
  }
}

</mosaic_0001>

<llo_original>
// kernel: posterior_encoder_forward.1
$region0: #{posterior_encoder_forward.1}
  #allocation0 [shape = 'u32[]', space=smem, size = 0x4, offset = 0x4, fixed_abs, tag = 'smem constant byte address 0x4 - core index']
  #allocation1 [shape = 'u32[144,128]{1,0:T(1,128)}', space=vmem, size = 0x12000, scoped, tag = 'internal scratch']
  #allocation2 [shape = 's32[1]{0}', space=sflag, size = 0x4, scoped, tag = 'scoped memory for posterior_encoder_forward.1']
  #allocation3 [shape = 'u8[512]{0}', space=smem, size = 0x200, scoped, tag = 'prefetched SMEM operand 0']
  %s0 = inlined_call_operand.hbm [shape: s32[2], index: 0, kind: input, shape index: {}]
  %s1 = inlined_call_operand.hbm [shape: f32[2,16,32], index: 1, kind: input, shape index: {}]
  %s2 = inlined_call_operand.hbm [shape: f32[2,16,32], index: 2, kind: input, shape index: {}]
  %s3 = inlined_call_operand.hbm [shape: bf16[32,64], index: 3, kind: input, shape index: {}]
  %s4 = inlined_call_operand.hbm [shape: f32[1,64], index: 4, kind: input, shape index: {}]
  %s5 = inlined_call_operand.hbm [shape: bf16[4,320,128], index: 5, kind: input, shape index: {}]
  %s6 = inlined_call_operand.hbm [shape: f32[4,1,128], index: 6, kind: input, shape index: {}]
  %s7 = inlined_call_operand.hbm [shape: bf16[4,64,128], index: 7, kind: input, shape index: {}]
  %s8 = inlined_call_operand.hbm [shape: f32[4,1,128], index: 8, kind: input, shape index: {}]
  %s9 = inlined_call_operand.hbm [shape: bf16[64,64], index: 9, kind: input, shape index: {}]
  %s10 = inlined_call_operand.hbm [shape: f32[1,64], index: 10, kind: input, shape index: {}]
  %s11 = inlined_call_operand.hbm [shape: f32[2,16,32], index: 11, kind: output, shape index: {0}]
  %s12 = inlined_call_operand.hbm [shape: f32[2,16,32], index: 12, kind: output, shape index: {1}]
  %s13 = inlined_call_operand.hbm [shape: f32[2,16,32], index: 13, kind: output, shape index: {2}]
  %14 = xla_tuple %s11, %s12, %s13
  %s15 = sld [smem:[#allocation0]]
  $region129: #{posterior_encoder_forward.1} parent=0
    _
  %s17 = ssub.s32 1, %s15
  %s18 = scalar_select 0, %s17, %s15
  %20 = dma.hbm_to_smem %s0, 16, [#allocation3], [#allocation2]
  %21 = dma.done [#allocation2], 16
  %22 = sfence
  $region1: #{posterior_encoder_forward.1} parent=0
    #allocation4 [shape = 'u8[16384]{0}', space=vmem, size = 0x4000, scoped, tag = 'input window, operand 1']
    #allocation5 [shape = 's32[2]{0}', space=sflag, size = 0x8, scoped, tag = 'scoped memory for posterior_encoder_forward.1']
    #allocation6 [shape = 's32[2]{0}', space=sflag, size = 0x8, scoped, tag = 'scoped memory for posterior_encoder_forward.1']
    #allocation7 [shape = 'u8[16384]{0}', space=vmem, size = 0x4000, scoped, tag = 'input window, operand 2']
    #allocation8 [shape = 's32[2]{0}', space=sflag, size = 0x8, scoped, tag = 'scoped memory for posterior_encoder_forward.1']
    #allocation9 [shape = 'u8[8192]{0}', space=vmem, size = 0x2000, scoped, tag = 'input window, operand 3, single buffered']
    #allocation10 [shape = 'u8[512]{0}', space=vmem, size = 0x400, scoped, tag = 'input window, operand 4, single buffered']
    #allocation11 [shape = 's32[1]{0}', space=sflag, size = 0x4, scoped, tag = 'scoped memory for posterior_encoder_forward.1']
    #allocation12 [shape = 'u8[327680]{0}', space=vmem, size = 0x50000, scoped, tag = 'input window, operand 5, single buffered']
    #allocation13 [shape = 'u8[2048]{0}', space=vmem, size = 0x800, scoped, tag = 'input window, operand 6, single buffered']
    #allocation14 [shape = 's32[1]{0}', space=sflag, size = 0x4, scoped, tag = 'scoped memory for posterior_encoder_forward.1']
    #allocation15 [shape = 'u8[65536]{0}', space=vmem, size = 0x10000, scoped, tag = 'input window, operand 7, single buffered']
    #allocation16 [shape = 'u8[2048]{0}', space=vmem, size = 0x800, scoped, tag = 'input window, operand 8, single buffered']
    #allocation17 [shape = 's32[1]{0}', space=sflag, size = 0x4, scoped, tag = 'scoped memory for posterior_encoder_forward.1']
    #allocation18 [shape = 'u8[16384]{0}', space=vmem, size = 0x4000, scoped, tag = 'input window, operand 9, single buffered']
    #allocation19 [shape = 'u8[512]{0}', space=vmem, size = 0x400, scoped, tag = 'input window, operand 10, single buffered']
    #allocation20 [shape = 's32[1]{0}', space=sflag, size = 0x4, scoped, tag = 'scoped memory for posterior_encoder_forward.1']
    #allocation21 [shape = 'u8[16384]{0}', space=vmem, size = 0x4000, scoped, tag = 'output window, operand 0']
    #allocation22 [shape = 'u8[16384]{0}', space=vmem, size = 0x4000, scoped, tag = 'output window, operand 1']
    #allocation23 [shape = 's32[2]{0}', space=sflag, size = 0x8, scoped, tag = 'scoped memory for posterior_encoder_forward.1']
    #allocation24 [shape = 'u8[16384]{0}', space=vmem, size = 0x4000, scoped, tag = 'output window, operand 2']
    %23 = vsyncpa [#allocation5], 0
    %s24 = scalar_lea.sflag [#allocation5], 1
    %25 = vsyncpa %s24, 0
    %26 = vsyncpa [#allocation8], 0
    %s27 = scalar_lea.sflag [#allocation8], 1
    %28 = vsyncpa %s27, 0
    %29 = vsyncpa [#allocation11], 0
    %30 = vsyncpa [#allocation14], 0
    %31 = vsyncpa [#allocation17], 0
    %32 = vsyncpa [#allocation20], 0
    %33 = vsyncpa [#allocation6], 0
    %s34 = scalar_lea.sflag [#allocation6], 1
    %35 = vsyncpa %s34, 0
    %36 = vsyncpa [#allocation23], 0
    %s37 = scalar_lea.sflag [#allocation23], 1
    %38 = vsyncpa %s37, 0
    loop: start=0, step=1, limit=4
    $region2: #{posterior_encoder_forward.1} parent=1 // loop_pre_header
      _
    $region3: #{posterior_encoder_forward.1} parent=1 // loop_header
      %s40 = sphi 0, %s44
      %p41 = scmp.ge.s32.totalorder %s40, 4
      %s50 = sphi 0, %s52
      %s53 = sphi 0, %s50
      %s54 = sphi 0, %s53
      %s70 = sphi 0, %s54
      %s76 = sphi 0, %s78
      %s79 = sphi 0, %s76
      %s80 = sphi 0, %s79
      %s96 = sphi 0, %s80
      %s100 = sphi 0, %s100
      %s102 = sphi 0, %s100
      %s103 = sphi 0, %s102
      %s117 = sphi 0, %s103
      %s121 = sphi 0, %s121
      %s123 = sphi 0, %s121
      %s124 = sphi 0, %s123
      %s138 = sphi 0, %s124
      %s142 = sphi 0, %s142
      %s144 = sphi 0, %s142
      %s145 = sphi 0, %s144
      %s159 = sphi 0, %s145
      %s163 = sphi 0, %s163
      %s165 = sphi 0, %s163
      %s166 = sphi 0, %s165
      %s180 = sphi 0, %s166
      %s184 = sphi 0, %s184
      %s186 = sphi 0, %s184
      %s187 = sphi 0, %s186
      %s201 = sphi 0, %s187
      %s205 = sphi 0, %s205
      %s207 = sphi 0, %s205
      %s208 = sphi 0, %s207
      %s222 = sphi 0, %s208
      %s226 = sphi 0, %s226
      %s228 = sphi 0, %s226
      %s229 = sphi 0, %s228
      %s243 = sphi 0, %s229
      %s247 = sphi 0, %s247
      %s249 = sphi 0, %s247
      %s250 = sphi 0, %s249
      %s264 = sphi 0, %s250
      %s270 = sphi 0, %s272
      %s273 = sphi 0, %s270
      %s274 = sphi 0, %s273
      %s290 = sphi 0, %s274
      %s296 = sphi 0, %s298
      %s299 = sphi 0, %s296
      %s300 = sphi 0, %s299
      %s316 = sphi 0, %s300
      %s322 = sphi 0, %s324
      %s325 = sphi 0, %s322
      %s326 = sphi 0, %s325
      %s342 = sphi 0, %s326
    $region4: #{posterior_encoder_forward.1} parent=1 // loop_header_branch
      %43 = sbr.rel (%p41) target = $region8
    $region5: #{posterior_encoder_forward.1} parent=1 // loop_body
      %s45 = ssub.s32 %s40, 1
      %s46 = ssub.s32 %s40, 2
      %s47 = sadd.s32 %s40, 1
      %s48 = ssub.s32 %s40, %s47
      %p49 = scmp.eq.s32.totalorder %s48, 0
      %s51 = sadd.s32 %s50, 1
      %s52 = scalar_select %p49, %s50, %s51
      %p55 = pneg %p49
      %p56 = scmp.eq.s32.totalorder %s40, 1
      %p57 = por %p55, %p56
      %p58 = scmp.ne.s32.totalorder %s50, %s53
      %p59 = scmp.eq.s32.totalorder %s40, 0
      %p60 = por %p58, %p59
      %p61 = scmp.ne.s32.totalorder %s50, %s53
      %p62 = scmp.eq.s32.totalorder %s45, 1
      %p63 = por %p61, %p62
      %p64 = scmp.ne.s32.totalorder %s53, %s54
      %p65 = scmp.eq.s32.totalorder %s45, 0
      %p66 = por %p64, %p65
      %p67 = scmp.ne.s32.totalorder %s53, %s54
      %p68 = scmp.eq.s32.totalorder %s46, 1
      %p69 = por %p67, %p68
      %p71 = scmp.ne.s32.totalorder %s54, %s70
      %p72 = scmp.eq.s32.totalorder %s46, 0
      %p73 = por %p71, %p72
      %s74 = ssub.s32 %s40, %s47
      %p75 = scmp.eq.s32.totalorder %s74, 0
      %s77 = sadd.s32 %s76, 1
      %s78 = scalar_select %p75, %s76, %s77
      %p81 = pneg %p75
      %p82 = scmp.eq.s32.totalorder %s40, 1
      %p83 = por %p81, %p82
      %p84 = scmp.ne.s32.totalorder %s76, %s79
      %p85 = scmp.eq.s32.totalorder %s40, 0
      %p86 = por %p84, %p85
      %p87 = scmp.ne.s32.totalorder %s76, %s79
      %p88 = scmp.eq.s32.totalorder %s45, 1
      %p89 = por %p87, %p88
      %p90 = scmp.ne.s32.totalorder %s79, %s80
      %p91 = scmp.eq.s32.totalorder %s45, 0
      %p92 = por %p90, %p91
      %p93 = scmp.ne.s32.totalorder %s79, %s80
      %p94 = scmp.eq.s32.totalorder %s46, 1
      %p95 = por %p93, %p94
      %p97 = scmp.ne.s32.totalorder %s80, %s96
      %p98 = scmp.eq.s32.totalorder %s46, 0
      %p99 = por %p97, %p98
      %s101 = sadd.s32 %s100, 1
      %p104 = scmp.eq.s32.totalorder %s40, 1
      %p105 = scmp.ne.s32.totalorder %s100, %s102
      %p106 = scmp.eq.s32.totalorder %s40, 0
      %p107 = por %p105, %p106
      %p108 = scmp.ne.s32.totalorder %s100, %s102
      %p109 = scmp.eq.s32.totalorder %s45, 1
      %p110 = por %p108, %p109
      %p111 = scmp.ne.s32.totalorder %s102, %s103
      %p112 = scmp.eq.s32.totalorder %s45, 0
      %p113 = por %p111, %p112
      %p114 = scmp.ne.s32.totalorder %s102, %s103
      %p115 = scmp.eq.s32.totalorder %s46, 1
      %p116 = por %p114, %p115
      %p118 = scmp.ne.s32.totalorder %s103, %s117
      %p119 = scmp.eq.s32.totalorder %s46, 0
      %p120 = por %p118, %p119
      %s122 = sadd.s32 %s121, 1
      %p125 = scmp.eq.s32.totalorder %s40, 1
      %p126 = scmp.ne.s32.totalorder %s121, %s123
      %p127 = scmp.eq.s32.totalorder %s40, 0
      %p128 = por %p126, %p127
      %p129 = scmp.ne.s32.totalorder %s121, %s123
      %p130 = scmp.eq.s32.totalorder %s45, 1
      %p131 = por %p129, %p130
      %p132 = scmp.ne.s32.totalorder %s123, %s124
      %p133 = scmp.eq.s32.totalorder %s45, 0
      %p134 = por %p132, %p133
      %p135 = scmp.ne.s32.totalorder %s123, %s124
      %p136 = scmp.eq.s32.totalorder %s46, 1
      %p137 = por %p135, %p136
      %p139 = scmp.ne.s32.totalorder %s124, %s138
      %p140 = scmp.eq.s32.totalorder %s46, 0
      %p141 = por %p139, %p140
      %s143 = sadd.s32 %s142, 1
      %p146 = scmp.eq.s32.totalorder %s40, 1
      %p147 = scmp.ne.s32.totalorder %s142, %s144
      %p148 = scmp.eq.s32.totalorder %s40, 0
      %p149 = por %p147, %p148
      %p150 = scmp.ne.s32.totalorder %s142, %s144
      %p151 = scmp.eq.s32.totalorder %s45, 1
      %p152 = por %p150, %p151
      %p153 = scmp.ne.s32.totalorder %s144, %s145
      %p154 = scmp.eq.s32.totalorder %s45, 0
      %p155 = por %p153, %p154
      %p156 = scmp.ne.s32.totalorder %s144, %s145
      %p157 = scmp.eq.s32.totalorder %s46, 1
      %p158 = por %p156, %p157
      %p160 = scmp.ne.s32.totalorder %s145, %s159
      %p161 = scmp.eq.s32.totalorder %s46, 0
      %p162 = por %p160, %p161
      %s164 = sadd.s32 %s163, 1
      %p167 = scmp.eq.s32.totalorder %s40, 1
      %p168 = scmp.ne.s32.totalorder %s163, %s165
      %p169 = scmp.eq.s32.totalorder %s40, 0
      %p170 = por %p168, %p169
      %p171 = scmp.ne.s32.totalorder %s163, %s165
      %p172 = scmp.eq.s32.totalorder %s45, 1
      %p173 = por %p171, %p172
      %p174 = scmp.ne.s32.totalorder %s165, %s166
      %p175 = scmp.eq.s32.totalorder %s45, 0
      %p176 = por %p174, %p175
      %p177 = scmp.ne.s32.totalorder %s165, %s166
      %p178 = scmp.eq.s32.totalorder %s46, 1
      %p179 = por %p177, %p178
      %p181 = scmp.ne.s32.totalorder %s166, %s180
      %p182 = scmp.eq.s32.totalorder %s46, 0
      %p183 = por %p181, %p182
      %s185 = sadd.s32 %s184, 1
      %p188 = scmp.eq.s32.totalorder %s40, 1
      %p189 = scmp.ne.s32.totalorder %s184, %s186
      %p190 = scmp.eq.s32.totalorder %s40, 0
      %p191 = por %p189, %p190
      %p192 = scmp.ne.s32.totalorder %s184, %s186
      %p193 = scmp.eq.s32.totalorder %s45, 1
      %p194 = por %p192, %p193
      %p195 = scmp.ne.s32.totalorder %s186, %s187
      %p196 = scmp.eq.s32.totalorder %s45, 0
      %p197 = por %p195, %p196
      %p198 = scmp.ne.s32.totalorder %s186, %s187
      %p199 = scmp.eq.s32.totalorder %s46, 1
      %p200 = por %p198, %p199
      %p202 = scmp.ne.s32.totalorder %s187, %s201
      %p203 = scmp.eq.s32.totalorder %s46, 0
      %p204 = por %p202, %p203
      %s206 = sadd.s32 %s205, 1
      %p209 = scmp.eq.s32.totalorder %s40, 1
      %p210 = scmp.ne.s32.totalorder %s205, %s207
      %p211 = scmp.eq.s32.totalorder %s40, 0
      %p212 = por %p210, %p211
      %p213 = scmp.ne.s32.totalorder %s205, %s207
      %p214 = scmp.eq.s32.totalorder %s45, 1
      %p215 = por %p213, %p214
      %p216 = scmp.ne.s32.totalorder %s207, %s208
      %p217 = scmp.eq.s32.totalorder %s45, 0
      %p218 = por %p216, %p217
      %p219 = scmp.ne.s32.totalorder %s207, %s208
      %p220 = scmp.eq.s32.totalorder %s46, 1
      %p221 = por %p219, %p220
      %p223 = scmp.ne.s32.totalorder %s208, %s222
      %p224 = scmp.eq.s32.totalorder %s46, 0
      %p225 = por %p223, %p224
      %s227 = sadd.s32 %s226, 1
      %p230 = scmp.eq.s32.totalorder %s40, 1
      %p231 = scmp.ne.s32.totalorder %s226, %s228
      %p232 = scmp.eq.s32.totalorder %s40, 0
      %p233 = por %p231, %p232
      %p234 = scmp.ne.s32.totalorder %s226, %s228
      %p235 = scmp.eq.s32.totalorder %s45, 1
      %p236 = por %p234, %p235
      %p237 = scmp.ne.s32.totalorder %s228, %s229
      %p238 = scmp.eq.s32.totalorder %s45, 0
      %p239 = por %p237, %p238
      %p240 = scmp.ne.s32.totalorder %s228, %s229
      %p241 = scmp.eq.s32.totalorder %s46, 1
      %p242 = por %p240, %p241
      %p244 = scmp.ne.s32.totalorder %s229, %s243
      %p245 = scmp.eq.s32.totalorder %s46, 0
      %p246 = por %p244, %p245
      %s248 = sadd.s32 %s247, 1
      %p251 = scmp.eq.s32.totalorder %s40, 1
      %p252 = scmp.ne.s32.totalorder %s247, %s249
      %p253 = scmp.eq.s32.totalorder %s40, 0
      %p254 = por %p252, %p253
      %p255 = scmp.ne.s32.totalorder %s247, %s249
      %p256 = scmp.eq.s32.totalorder %s45, 1
      %p257 = por %p255, %p256
      %p258 = scmp.ne.s32.totalorder %s249, %s250
      %p259 = scmp.eq.s32.totalorder %s45, 0
      %p260 = por %p258, %p259
      %p261 = scmp.ne.s32.totalorder %s249, %s250
      %p262 = scmp.eq.s32.totalorder %s46, 1
      %p263 = por %p261, %p262
      %p265 = scmp.ne.s32.totalorder %s250, %s264
      %p266 = scmp.eq.s32.totalorder %s46, 0
      %p267 = por %p265, %p266
      %s268 = ssub.s32 %s40, %s47
      %p269 = scmp.eq.s32.totalorder %s268, 0
      %s271 = sadd.s32 %s270, 1
      %s272 = scalar_select %p269, %s270, %s271
      %p275 = pneg %p269
      %p276 = scmp.eq.s32.totalorder %s40, 1
      %p277 = por %p275, %p276
      %p278 = scmp.ne.s32.totalorder %s270, %s273
      %p279 = scmp.eq.s32.totalorder %s40, 0
      %p280 = por %p278, %p279
      %p281 = scmp.ne.s32.totalorder %s270, %s273
      %p282 = scmp.eq.s32.totalorder %s45, 1
      %p283 = por %p281, %p282
      %p284 = scmp.ne.s32.totalorder %s273, %s274
      %p285 = scmp.eq.s32.totalorder %s45, 0
      %p286 = por %p284, %p285
      %p287 = scmp.ne.s32.totalorder %s273, %s274
      %p288 = scmp.eq.s32.totalorder %s46, 1
      %p289 = por %p287, %p288
      %p291 = scmp.ne.s32.totalorder %s274, %s290
      %p292 = scmp.eq.s32.totalorder %s46, 0
      %p293 = por %p291, %p292
      %s294 = ssub.s32 %s40, %s47
      %p295 = scmp.eq.s32.totalorder %s294, 0
      %s297 = sadd.s32 %s296, 1
      %s298 = scalar_select %p295, %s296, %s297
      %p301 = pneg %p295
      %p302 = scmp.eq.s32.totalorder %s40, 1
      %p303 = por %p301, %p302
      %p304 = scmp.ne.s32.totalorder %s296, %s299
      %p305 = scmp.eq.s32.totalorder %s40, 0
      %p306 = por %p304, %p305
      %p307 = scmp.ne.s32.totalorder %s296, %s299
      %p308 = scmp.eq.s32.totalorder %s45, 1
      %p309 = por %p307, %p308
      %p310 = scmp.ne.s32.totalorder %s299, %s300
      %p311 = scmp.eq.s32.totalorder %s45, 0
      %p312 = por %p310, %p311
      %p313 = scmp.ne.s32.totalorder %s299, %s300
      %p314 = scmp.eq.s32.totalorder %s46, 1
      %p315 = por %p313, %p314
      %p317 = scmp.ne.s32.totalorder %s300, %s316
      %p318 = scmp.eq.s32.totalorder %s46, 0
      %p319 = por %p317, %p318
      %s320 = ssub.s32 %s40, %s47
      %p321 = scmp.eq.s32.totalorder %s320, 0
      %s323 = sadd.s32 %s322, 1
      %s324 = scalar_select %p321, %s322, %s323
      %p327 = pneg %p321
      %p328 = scmp.eq.s32.totalorder %s40, 1
      %p329 = por %p327, %p328
      %p330 = scmp.ne.s32.totalorder %s322, %s325
      %p331 = scmp.eq.s32.totalorder %s40, 0
      %p332 = por %p330, %p331
      %p333 = scmp.ne.s32.totalorder %s322, %s325
      %p334 = scmp.eq.s32.totalorder %s45, 1
      %p335 = por %p333, %p334
      %p336 = scmp.ne.s32.totalorder %s325, %s326
      %p337 = scmp.eq.s32.totalorder %s45, 0
      %p338 = por %p336, %p337
      %p339 = scmp.ne.s32.totalorder %s325, %s326
      %p340 = scmp.eq.s32.totalorder %s46, 1
      %p341 = por %p339, %p340
      %p343 = scmp.ne.s32.totalorder %s326, %s342
      %p344 = scmp.eq.s32.totalorder %s46, 0
      %p345 = por %p343, %p344
      %p346 = scmp.le.s32.totalorder 1, %s40
      %p347 = scmp.lt.s32.totalorder %s40, 3
      %p348 = pnand %p346, %p347
      %p349 = pneg %p348
      // Predicated region
      $region9: #{posterior_encoder_forward.1} parent=5 // pred_check
        _
      $region10: #{posterior_encoder_forward.1} parent=5 // pred_check_branch
        %351 = sbr.rel (%p348) target = $region12
      $region11: #{posterior_encoder_forward.1} parent=5 // pred_region
        %s352 = ssub.s32 %s40, 1
        // Predicated region
        $region13: #{posterior_encoder_forward.1} parent=11 // pred_check
          %p353 = pneg %p113
        $region14: #{posterior_encoder_forward.1} parent=11 // pred_check_branch
          %355 = sbr.rel (%p353) target = $region16
        $region15: #{posterior_encoder_forward.1} parent=11 // pred_region
          %s357 = ssub.s32 256, 256
          %358 = vsyncadd [#allocation8], %s357
          %s359 = sshll.u32 [#allocation9], 4
          %s360 = int_to_ptr.vmem [resolvable:$true] %s359
          %365 = dma.hbm_to_vmem [thread:$0]  %s3, 256, %s360, [#allocation8], 64, 64, 4
        $region16: #{posterior_encoder_forward.1} parent=11 // pred_fallthru
          _
        // Predicated region
        $region17: #{posterior_encoder_forward.1} parent=11 // pred_check
          %p366 = pneg %p134
        $region18: #{posterior_encoder_forward.1} parent=11 // pred_check_branch
          %368 = sbr.rel (%p366) target = $region20
        $region19: #{posterior_encoder_forward.1} parent=11 // pred_region
          %s370 = ssub.s32 16, 16
          %371 = vsyncadd [#allocation11], %s370
          %s373 = sshll.u32 [#allocation10], 4
          %s374 = int_to_ptr.vmem [resolvable:$true] %s373
          %376 = dma.hbm_to_vmem [thread:$0]  %s4, 16, %s374, [#allocation11]
        $region20: #{posterior_encoder_forward.1} parent=11 // pred_fallthru
          _
        // Predicated region
        $region21: #{posterior_encoder_forward.1} parent=11 // pred_check
          %p377 = pneg %p155
        $region22: #{posterior_encoder_forward.1} parent=11 // pred_check_branch
          %379 = sbr.rel (%p377) target = $region24
        $region23: #{posterior_encoder_forward.1} parent=11 // pred_region
          %s381 = ssub.s32 10240, 10240
          %382 = vsyncadd [#allocation11], %s381
          %s383 = sshll.u32 [#allocation12], 4
          %s384 = int_to_ptr.vmem [resolvable:$true] %s383
          %389 = dma.hbm_to_vmem [thread:$0]  %s5, 10240, %s384, [#allocation11], 64, 64, 4
        $region24: #{posterior_encoder_forward.1} parent=11 // pred_fallthru
          _
        // Predicated region
        $region25: #{posterior_encoder_forward.1} parent=11 // pred_check
          %p390 = pneg %p176
        $region26: #{posterior_encoder_forward.1} parent=11 // pred_check_branch
          %392 = sbr.rel (%p390) target = $region28
        $region27: #{posterior_encoder_forward.1} parent=11 // pred_region
          %s394 = ssub.s32 64, 64
          %395 = vsyncadd [#allocation14], %s394
          %s396 = sshll.u32 [#allocation13], 4
          %s397 = int_to_ptr.vmem [resolvable:$true] %s396
          %402 = dma.hbm_to_vmem [thread:$0]  %s6, 64, %s397, [#allocation14], 16, 16, 1
        $region28: #{posterior_encoder_forward.1} parent=11 // pred_fallthru
          _
        // Predicated region
        $region29: #{posterior_encoder_forward.1} parent=11 // pred_check
          %p403 = pneg %p197
        $region30: #{posterior_encoder_forward.1} parent=11 // pred_check_branch
          %405 = sbr.rel (%p403) target = $region32
        $region31: #{posterior_encoder_forward.1} parent=11 // pred_region
          %s407 = ssub.s32 2048, 2048
          %408 = vsyncadd [#allocation14], %s407
          %s409 = sshll.u32 [#allocation15], 4
          %s410 = int_to_ptr.vmem [resolvable:$true] %s409
          %415 = dma.hbm_to_vmem [thread:$0]  %s7, 2048, %s410, [#allocation14], 64, 64, 4
        $region32: #{posterior_encoder_forward.1} parent=11 // pred_fallthru
          _
        // Predicated region
        $region33: #{posterior_encoder_forward.1} parent=11 // pred_check
          %p416 = pneg %p218
        $region34: #{posterior_encoder_forward.1} parent=11 // pred_check_branch
          %418 = sbr.rel (%p416) target = $region36
        $region35: #{posterior_encoder_forward.1} parent=11 // pred_region
          %s420 = ssub.s32 64, 64
          %421 = vsyncadd [#allocation17], %s420
          %s422 = sshll.u32 [#allocation16], 4
          %s423 = int_to_ptr.vmem [resolvable:$true] %s422
          %428 = dma.hbm_to_vmem [thread:$0]  %s8, 64, %s423, [#allocation17], 16, 16, 1
        $region36: #{posterior_encoder_forward.1} parent=11 // pred_fallthru
          _
        // Predicated region
        $region37: #{posterior_encoder_forward.1} parent=11 // pred_check
          %p429 = pneg %p239
        $region38: #{posterior_encoder_forward.1} parent=11 // pred_check_branch
          %431 = sbr.rel (%p429) target = $region40
        $region39: #{posterior_encoder_forward.1} parent=11 // pred_region
          %s433 = ssub.s32 512, 512
          %434 = vsyncadd [#allocation17], %s433
          %s435 = sshll.u32 [#allocation18], 4
          %s436 = int_to_ptr.vmem [resolvable:$true] %s435
          %441 = dma.hbm_to_vmem [thread:$0]  %s9, 512, %s436, [#allocation17], 64, 64, 4
        $region40: #{posterior_encoder_forward.1} parent=11 // pred_fallthru
          _
        // Predicated region
        $region41: #{posterior_encoder_forward.1} parent=11 // pred_check
          %p442 = pneg %p260
        $region42: #{posterior_encoder_forward.1} parent=11 // pred_check_branch
          %444 = sbr.rel (%p442) target = $region44
        $region43: #{posterior_encoder_forward.1} parent=11 // pred_region
          %s446 = ssub.s32 16, 16
          %447 = vsyncadd [#allocation20], %s446
          %s449 = sshll.u32 [#allocation19], 4
          %s450 = int_to_ptr.vmem [resolvable:$true] %s449
          %452 = dma.hbm_to_vmem [thread:$0]  %s10, 16, %s450, [#allocation20]
        $region44: #{posterior_encoder_forward.1} parent=11 // pred_fallthru
          _
      $region12: #{posterior_encoder_forward.1} parent=5 // pred_fallthru
        _
      %p453 = scmp.lt.s32.totalorder %s40, 2
      // Predicated region
      $region45: #{posterior_encoder_forward.1} parent=5 // pred_check
        %p454 = pneg %p453
      $region46: #{posterior_encoder_forward.1} parent=5 // pred_check_branch
        %456 = sbr.rel (%p454) target = $region48
      $region47: #{posterior_encoder_forward.1} parent=5 // pred_region
        // Predicated region
        $region49: #{posterior_encoder_forward.1} parent=47 // pred_check
          %p457 = pneg %p60
        $region50: #{posterior_encoder_forward.1} parent=47 // pred_check_branch
          %459 = sbr.rel (%p457) target = $region52
        $region51: #{posterior_encoder_forward.1} parent=47 // pred_region
          %s460 = sand.u32 %s50, 1
          %s461 = scalar_lea.sflag [#allocation5], %s460
          %s462 = sand.u32 %s50, 1
          %s463 = smul.addr %s462, 16
          %s464 = scalar_lea.vmem [#allocation4], %s463
          %s466 = ssub.s32 256, 256
          %467 = vsyncadd %s461, %s466
          %s468 = smul.addr %s40, 2
          %s469 = smul.addr %s468, 128
          %s470 = scalar_lea.hbm %s1, %s469
          %s471 = sshll.u32 %s464, 4
          %s472 = int_to_ptr.vmem [resolvable:$true] %s471
          %477 = dma.hbm_to_vmem [thread:$0]  %s470, 256, %s472, %s461, 128, 128, 8
        $region52: #{posterior_encoder_forward.1} parent=47 // pred_fallthru
          _
        // Predicated region
        $region53: #{posterior_encoder_forward.1} parent=47 // pred_check
          %p478 = pneg %p86
        $region54: #{posterior_encoder_forward.1} parent=47 // pred_check_branch
          %480 = sbr.rel (%p478) target = $region56
        $region55: #{posterior_encoder_forward.1} parent=47 // pred_region
          %s481 = sand.u32 %s40, 1
          %s482 = scalar_lea.sflag [#allocation8], %s481
          %s483 = sand.u32 %s76, 1
          %s484 = smul.addr %s483, 16
          %s485 = scalar_lea.vmem [#allocation7], %s484
          %s487 = ssub.s32 256, 256
          %488 = vsyncadd %s482, %s487
          %s489 = smul.addr %s40, 2
          %s490 = smul.addr %s489, 128
          %s491 = scalar_lea.hbm %s2, %s490
          %s492 = sshll.u32 %s485, 4
          %s493 = int_to_ptr.vmem [resolvable:$true] %s492
          %498 = dma.hbm_to_vmem [thread:$0]  %s491, 256, %s493, %s482, 128, 128, 8
        $region56: #{posterior_encoder_forward.1} parent=47 // pred_fallthru
          _
      $region48: #{posterior_encoder_forward.1} parent=5 // pred_fallthru
        _
      %p499 = scmp.le.s32.totalorder 1, %s40
      %p500 = scmp.lt.s32.totalorder %s40, 3
      %p501 = pnand %p499, %p500
      %p502 = pneg %p501
      // Predicated region
      $region57: #{posterior_encoder_forward.1} parent=5 // pred_check
        _
      $region58: #{posterior_encoder_forward.1} parent=5 // pred_check_branch
        %504 = sbr.rel (%p501) target = $region60
      $region59: #{posterior_encoder_forward.1} parent=5 // pred_region
        %s505 = ssub.s32 %s40, 1
        %s506 = sand.u32 %s53, 1
        %s507 = scalar_lea.sflag [#allocation5], %s506
        %s508 = sand.u32 %s53, 1
        %s509 = smul.addr %s508, 16
        %s510 = scalar_lea.vmem [#allocation4], %s509
        // Predicated region
        $region61: #{posterior_encoder_forward.1} parent=59 // pred_check
          %p511 = pneg %p66
        $region62: #{posterior_encoder_forward.1} parent=59 // pred_check_branch
          %513 = sbr.rel (%p511) target = $region64
        $region63: #{posterior_encoder_forward.1} parent=59 // pred_region
          %514 = dma.done %s507, 256
        $region64: #{posterior_encoder_forward.1} parent=59 // pred_fallthru
          _
        %s515 = sand.u32 %s45, 1
        %s516 = scalar_lea.sflag [#allocation8], %s515
        %s517 = sand.u32 %s79, 1
        %s518 = smul.addr %s517, 16
        %s519 = scalar_lea.vmem [#allocation7], %s518
        // Predicated region
        $region65: #{posterior_encoder_forward.1} parent=59 // pred_check
          %p520 = pneg %p92
        $region66: #{posterior_encoder_forward.1} parent=59 // pred_check_branch
          %522 = sbr.rel (%p520) target = $region68
        $region67: #{posterior_encoder_forward.1} parent=59 // pred_region
          %523 = dma.done %s516, 256
        $region68: #{posterior_encoder_forward.1} parent=59 // pred_fallthru
          _
        // Predicated region
        $region69: #{posterior_encoder_forward.1} parent=59 // pred_check
          %p524 = pneg %p113
        $region70: #{posterior_encoder_forward.1} parent=59 // pred_check_branch
          %526 = sbr.rel (%p524) target = $region72
        $region71: #{posterior_encoder_forward.1} parent=59 // pred_region
          %527 = dma.done [#allocation8], 256
        $region72: #{posterior_encoder_forward.1} parent=59 // pred_fallthru
          _
        // Predicated region
        $region73: #{posterior_encoder_forward.1} parent=59 // pred_check
          %p528 = pneg %p134
        $region74: #{posterior_encoder_forward.1} parent=59 // pred_check_branch
          %530 = sbr.rel (%p528) target = $region76
        $region75: #{posterior_encoder_forward.1} parent=59 // pred_region
          %531 = dma.done [#allocation11], 16
        $region76: #{posterior_encoder_forward.1} parent=59 // pred_fallthru
          _
        // Predicated region
        $region77: #{posterior_encoder_forward.1} parent=59 // pred_check
          %p532 = pneg %p155
        $region78: #{posterior_encoder_forward.1} parent=59 // pred_check_branch
          %534 = sbr.rel (%p532) target = $region80
        $region79: #{posterior_encoder_forward.1} parent=59 // pred_region
          %535 = dma.done [#allocation11], 10240
        $region80: #{posterior_encoder_forward.1} parent=59 // pred_fallthru
          _
        // Predicated region
        $region81: #{posterior_encoder_forward.1} parent=59 // pred_check
          %p536 = pneg %p176
        $region82: #{posterior_encoder_forward.1} parent=59 // pred_check_branch
          %538 = sbr.rel (%p536) target = $region84
        $region83: #{posterior_encoder_forward.1} parent=59 // pred_region
          %539 = dma.done [#allocation14], 64
        $region84: #{posterior_encoder_forward.1} parent=59 // pred_fallthru
          _
        // Predicated region
        $region85: #{posterior_encoder_forward.1} parent=59 // pred_check
          %p540 = pneg %p197
        $region86: #{posterior_encoder_forward.1} parent=59 // pred_check_branch
          %542 = sbr.rel (%p540) target = $region88
        $region87: #{posterior_encoder_forward.1} parent=59 // pred_region
          %543 = dma.done [#allocation14], 2048
        $region88: #{posterior_encoder_forward.1} parent=59 // pred_fallthru
          _
        // Predicated region
        $region89: #{posterior_encoder_forward.1} parent=59 // pred_check
          %p544 = pneg %p218
        $region90: #{posterior_encoder_forward.1} parent=59 // pred_check_branch
          %546 = sbr.rel (%p544) target = $region92
        $region91: #{posterior_encoder_forward.1} parent=59 // pred_region
          %547 = dma.done [#allocation17], 64
        $region92: #{posterior_encoder_forward.1} parent=59 // pred_fallthru
          _
        // Predicated region
        $region93: #{posterior_encoder_forward.1} parent=59 // pred_check
          %p548 = pneg %p239
        $region94: #{posterior_encoder_forward.1} parent=59 // pred_check_branch
          %550 = sbr.rel (%p548) target = $region96
        $region95: #{posterior_encoder_forward.1} parent=59 // pred_region
          %551 = dma.done [#allocation17], 512
        $region96: #{posterior_encoder_forward.1} parent=59 // pred_fallthru
          _
        // Predicated region
        $region97: #{posterior_encoder_forward.1} parent=59 // pred_check
          %p552 = pneg %p260
        $region98: #{posterior_encoder_forward.1} parent=59 // pred_check_branch
          %554 = sbr.rel (%p552) target = $region100
        $region99: #{posterior_encoder_forward.1} parent=59 // pred_region
          %555 = dma.done [#allocation20], 16
        $region100: #{posterior_encoder_forward.1} parent=59 // pred_fallthru
          _
        %s556 = sand.u32 %s53, 1
        %s557 = scalar_lea.sflag [#allocation5], %s556
        %s558 = sand.u32 %s53, 1
        %s559 = smul.addr %s558, 16
        %s560 = scalar_lea.vmem [#allocation4], %s559
        %p561 = pneg %p66
        %p562 = pneg %p63
        %s563 = sand.u32 %s45, 1
        %s564 = scalar_lea.sflag [#allocation8], %s563
        %s565 = sand.u32 %s79, 1
        %s566 = smul.addr %s565, 16
        %s567 = scalar_lea.vmem [#allocation7], %s566
        %p568 = pneg %p92
        %p569 = pneg %p89
        %p570 = pneg %p113
        %p571 = pneg %p110
        %p572 = pneg %p134
        %p573 = pneg %p131
        %p574 = pneg %p155
        %p575 = pneg %p152
        %p576 = pneg %p176
        %p577 = pneg %p173
        %p578 = pneg %p197
        %p579 = pneg %p194
        %p580 = pneg %p218
        %p581 = pneg %p215
        %p582 = pneg %p239
        %p583 = pneg %p236
        %p584 = pneg %p260
        %p585 = pneg %p257
        %p586 = pneg %p286
        %p587 = pneg %p283
        %s588 = sand.u32 %s273, 1
        %s589 = scalar_lea.sflag [#allocation6], %s588
        %s590 = sand.u32 %s273, 1
        %s591 = smul.addr %s590, 16
        %s592 = scalar_lea.vmem [#allocation21], %s591
        %p593 = pneg %p312
        %p594 = pneg %p309
        %s595 = sand.u32 %s45, 1
        %s596 = scalar_lea.sflag [#allocation23], %s595
        %s597 = sand.u32 %s299, 1
        %s598 = smul.addr %s597, 16
        %s599 = scalar_lea.vmem [#allocation22], %s598
        %p600 = pneg %p338
        %p601 = pneg %p335
        %s602 = sand.u32 %s45, 1
        %s603 = scalar_lea.sflag [#allocation23], %s602
        %s604 = sand.u32 %s325, 1
        %s605 = smul.addr %s604, 16
        %s606 = scalar_lea.vmem [#allocation24], %s605
        %v608 = vlaneseq
        %v609 = vshrl.u32 %v608, 7
        %v610 = vadd.s32 %v609, 8
        %s611 = sld [smem:[#allocation3 + %s45]]
        %v612 = vstv %s611
        %vm613 = vcmp.lt.s32.totalorder %v609, %v612
        %vm614 = vcmp.lt.s32.totalorder %v610, %v612
        %v615 = vsel %vm613, 1, 0
        %v616 = vsel %vm614, 1, 0
        %v617 = vcvt.s32.f32 %v615
        %v618 = vcvt.s32.f32 %v616
        %v619 = vld [vmem:[%s510] sm:$0xff]
        %v620 = vld [vmem:[%s510 + $0x8] sm:$0xff]
        %v621 = vpack.c.bf16 %v620, %v619
        %v622 = vld [vmem:[#allocation9] sm:$0xf]
        %v623 = vld [vmem:[#allocation9 + $0x4] sm:$0xf]
        %v624 = vld [vmem:[#allocation9 + $0x8] sm:$0xf]
        %v625 = vld [vmem:[#allocation9 + $0xc] sm:$0xf]
        %v626 = vld [vmem:[#allocation10] sm:$0x1]
        %v628 = vlaneseq
        %v629 = vshrl.u32 %v628, 7
        %v630 = vsub.s32 0, %v629
        %v631 = vrot.slane %v626, %v630
        %v637 = vunpack.c.l.b16 %v622
        %v638 = vunpack.c.l.b16 %v623
        %v639 = vunpack.c.l.b16 %v624
        %v640 = vunpack.c.l.b16 %v625
        %v641 = vpack.c.b16 %v638, %v637
        %v642 = vpack.c.b16 %v640, %v639
        %vm645 = vcmask 261120
        %v647 = vsel %vm645, %v621, 0
        %649 = vmatprep.subr.bf16.mxu0 0
        %650 = vmatpush1.bf16.msra.mxu0 %v641
        %651 = vmatprep.subr.bf16.mxu0 0
        %652 = vmatpush1.bf16.msra.mxu0 %v642
        %653 = vmatprep.subr.bf16.mxu0 0
        %654 = vmatpush1.bf16.msra.mxu0 0
        %655 = vmatprep.subr.bf16.mxu0 0
        %656 = vmatpush1.bf16.msra.mxu0 0
        %657 = vmatprep.subr.bf16.mxu0 0
        %658 = vmatpush1.bf16.msra.mxu0 0
        %659 = vmatprep.subr.bf16.mxu0 0
        %660 = vmatpush1.bf16.msra.mxu0 0
        %661 = vmatprep.subr.bf16.mxu0 0
        %662 = vmatpush1.bf16.msra.mxu0 0
        %663 = vmatprep.subr.bf16.mxu0 0
        %664 = vmatpush1.bf16.msra.mxu0 0
        %665 = vmatprep.subr.bf16.mxu0 0
        %666 = vmatpush1.bf16.msra.mxu0 0
        %667 = vmatprep.subr.bf16.mxu0 0
        %668 = vmatpush1.bf16.msra.mxu0 0
        %669 = vmatprep.subr.bf16.mxu0 0
        %670 = vmatpush1.bf16.msra.mxu0 0
        %671 = vmatprep.subr.bf16.mxu0 0
        %672 = vmatpush1.bf16.msra.mxu0 0
        %673 = vmatprep.subr.bf16.mxu0 0
        %674 = vmatpush1.bf16.msra.mxu0 0
        %675 = vmatprep.subr.bf16.mxu0 0
        %676 = vmatpush1.bf16.msra.mxu0 0
        %677 = vmatprep.subr.bf16.mxu0 0
        %678 = vmatpush1.bf16.msra.mxu0 0
        %679 = vmatprep.subr.bf16.mxu0 0
        %680 = vmatpush1.bf16.msra.mxu0 0
        %681 = vmatprep.mubr.bf16.mxu0 0
        %682 = vmatmul.mubr.bf16.gmra.mrb[0].mxu0 %v647
        %v683 = vpop.f32.mrb[0].mxu0
        %v684 = vadd.f32 %v631, %v683
        %v685 = vpop.f32.mrb[0].mxu0
        %v686 = vpop.f32.mrb[0].mxu0
        %v687 = vadd.f32 %v631, %v686
        %v688 = vpop.f32.mrb[0].mxu0
        %689 = vdwg.mxu0
        %v690 = vmul.f32 %v684, %v617
        %v691 = vmul.f32 %v687, %v618
        %vm694 = vcmask 1041408
        %v695 = vrot.slane %v690, 6
        %v696 = vrot.slane %v691, 6
        %v697 = vsel %vm694, %v695, %v696
        %v701 = vsel %vm694, 0.0, %v695
        %v702 = vsel %vm694, %v696, 0.0
        %vm705 = vcmask 1046528
        %v706 = vrot.slane %v701, 1
        %v707 = vrot.slane %v697, 1
        %v708 = vsel %vm705, %v706, %v707
        %v709 = vrot.slane %v702, 1
        %v710 = vsel %vm705, %v707, %v709
        %711 = vrot.lane.b32.xlu0 %v708, 64
        %v712 = vpop.permute.xlu0 %711
        %713 = vrot.lane.b32.xlu0 %v710, 64
        %v714 = vpop.permute.xlu0 %713
        %vm717 = vcmask 1045504
        %v718 = vrot.slane %v701, 2
        %v719 = vrot.slane %v697, 2
        %v720 = vsel %vm717, %v718, %v719
        %v721 = vrot.slane %v702, 2
        %v722 = vsel %vm717, %v719, %v721
        %vm725 = vcmask 1044480
        %v726 = vrot.slane %v701, 3
        %v727 = vrot.slane %v697, 3
        %v728 = vsel %vm725, %v726, %v727
        %v729 = vrot.slane %v702, 3
        %v730 = vsel %vm725, %v727, %v729
        %731 = vrot.lane.b32.xlu0 %v728, 64
        %v732 = vpop.permute.xlu0 %731
        %733 = vrot.lane.b32.xlu0 %v730, 64
        %v734 = vpop.permute.xlu0 %733
        %vm737 = vcmask 1043456
        %v738 = vrot.slane %v701, 4
        %v739 = vrot.slane %v697, 4
        %v740 = vsel %vm737, %v738, %v739
        %v741 = vrot.slane %v702, 4
        %v742 = vsel %vm737, %v739, %v741
        %vm745 = vcmask 523264
        %v746 = vsel %vm745, %v701, %v712
        %v747 = vsel %vm745, %v697, %v714
        %v748 = vsel %vm745, %v720, %v732
        %v749 = vsel %vm745, %v722, %v734
        %v750 = vpack.c.bf16 %v747, %v746
        %v751 = vpack.c.bf16 %v749, %v748
        %v752 = vpack.c.bf16 %v742, %v740
        %v753 = vld [vmem:[#allocation12] sm:$0xf]
        %v754 = vld [vmem:[#allocation12 + $0x4] sm:$0xf]
        %v755 = vld [vmem:[#allocation12 + $0x8] sm:$0xf]
        %v756 = vld [vmem:[#allocation12 + $0xc] sm:$0xf]
        %v757 = vld [vmem:[#allocation12 + $0x10] sm:$0xf]
        %v758 = vld [vmem:[#allocation12 + $0x14] sm:$0xf]
        %v759 = vld [vmem:[#allocation12 + $0x18] sm:$0xf]
        %v760 = vld [vmem:[#allocation12 + $0x1c] sm:$0xf]
        %v761 = vld [vmem:[#allocation12 + $0x20] sm:$0xf]
        %v762 = vld [vmem:[#allocation12 + $0x24] sm:$0xf]
        %v763 = vld [vmem:[#allocation12 + $0x28] sm:$0xf]
        %v764 = vld [vmem:[#allocation12 + $0x2c] sm:$0xf]
        %v765 = vld [vmem:[#allocation12 + $0x30] sm:$0xf]
        %v766 = vld [vmem:[#allocation12 + $0x34] sm:$0xf]
        %v767 = vld [vmem:[#allocation12 + $0x38] sm:$0xf]
        %v768 = vld [vmem:[#allocation12 + $0x3c] sm:$0xf]
        %v769 = vld [vmem:[#allocation12 + $0x40] sm:$0xf]
        %v770 = vld [vmem:[#allocation12 + $0x44] sm:$0xf]
        %v771 = vld [vmem:[#allocation12 + $0x48] sm:$0xf]
        %v772 = vld [vmem:[#allocation12 + $0x4c] sm:$0xf]
        %v773 = vld [vmem:[#allocation12 + $0x50] sm:$0xf]
        %v774 = vld [vmem:[#allocation12 + $0x54] sm:$0xf]
        %v775 = vld [vmem:[#allocation12 + $0x58] sm:$0xf]
        %v776 = vld [vmem:[#allocation12 + $0x5c] sm:$0xf]
        %v777 = vld [vmem:[#allocation12 + $0x60] sm:$0xf]
        %v778 = vld [vmem:[#allocation12 + $0x64] sm:$0xf]
        %v779 = vld [vmem:[#allocation12 + $0x68] sm:$0xf]
        %v780 = vld [vmem:[#allocation12 + $0x6c] sm:$0xf]
        %v781 = vld [vmem:[#allocation12 + $0x70] sm:$0xf]
        %v782 = vld [vmem:[#allocation12 + $0x74] sm:$0xf]
        %v783 = vld [vmem:[#allocation12 + $0x78] sm:$0xf]
        %v784 = vld [vmem:[#allocation12 + $0x7c] sm:$0xf]
        %v785 = vld [vmem:[#allocation12 + $0x80] sm:$0xf]
        %v786 = vld [vmem:[#allocation12 + $0x84] sm:$0xf]
        %v787 = vld [vmem:[#allocation12 + $0x88] sm:$0xf]
        %v788 = vld [vmem:[#allocation12 + $0x8c] sm:$0xf]
        %v789 = vld [vmem:[#allocation12 + $0x90] sm:$0xf]
        %v790 = vld [vmem:[#allocation12 + $0x94] sm:$0xf]
        %v791 = vld [vmem:[#allocation12 + $0x98] sm:$0xf]
        %v792 = vld [vmem:[#allocation12 + $0x9c] sm:$0xf]
        %v793 = vld [vmem:[#allocation13] sm:$0x1]
        %v795 = vlaneseq
        %v796 = vshrl.u32 %v795, 7
        %v797 = vsub.s32 0, %v796
        %v798 = vrot.slane %v793, %v797
        %v840 = vunpack.c.l.b16 %v753
        %v841 = vunpack.c.l.b16 %v754
        %v842 = vunpack.c.l.b16 %v755
        %v843 = vunpack.c.l.b16 %v756
        %v844 = vunpack.c.l.b16 %v757
        %v845 = vunpack.c.l.b16 %v758
        %v846 = vunpack.c.l.b16 %v759
        %v847 = vunpack.c.l.b16 %v760
        %v848 = vunpack.c.l.b16 %v761
        %v849 = vunpack.c.l.b16 %v762
        %v850 = vunpack.c.l.b16 %v763
        %v851 = vunpack.c.l.b16 %v764
        %v852 = vunpack.c.l.b16 %v765
        %v853 = vunpack.c.l.b16 %v766
        %v854 = vunpack.c.l.b16 %v767
        %v855 = vunpack.c.l.b16 %v768
        %v856 = vunpack.c.l.b16 %v769
        %v857 = vunpack.c.l.b16 %v770
        %v858 = vunpack.c.l.b16 %v771
        %v859 = vunpack.c.l.b16 %v772
        %v860 = vunpack.c.l.b16 %v773
        %v861 = vunpack.c.l.b16 %v774
        %v862 = vunpack.c.l.b16 %v775
        %v863 = vunpack.c.l.b16 %v776
        %v864 = vunpack.c.l.b16 %v777
        %v865 = vunpack.c.l.b16 %v778
        %v866 = vunpack.c.l.b16 %v779
        %v867 = vunpack.c.l.b16 %v780
        %v868 = vunpack.c.l.b16 %v781
        %v869 = vunpack.c.l.b16 %v782
        %v870 = vunpack.c.l.b16 %v783
        %v871 = vunpack.c.l.b16 %v784
        %v872 = vunpack.c.l.b16 %v785
        %v873 = vunpack.c.l.b16 %v786
        %v874 = vunpack.c.l.b16 %v787
        %v875 = vunpack.c.l.b16 %v788
        %v876 = vunpack.c.l.b16 %v789
        %v877 = vunpack.c.l.b16 %v790
        %v878 = vunpack.c.l.b16 %v791
        %v879 = vunpack.c.l.b16 %v792
        %v880 = vpack.c.b16 %v841, %v840
        %v881 = vpack.c.b16 %v843, %v842
        %v882 = vpack.c.b16 %v845, %v844
        %v883 = vpack.c.b16 %v847, %v846
        %v884 = vpack.c.b16 %v849, %v848
        %v885 = vpack.c.b16 %v851, %v850
        %v886 = vpack.c.b16 %v853, %v852
        %v887 = vpack.c.b16 %v855, %v854
        %v888 = vpack.c.b16 %v857, %v856
        %v889 = vpack.c.b16 %v859, %v858
        %v890 = vpack.c.b16 %v861, %v860
        %v891 = vpack.c.b16 %v863, %v862
        %v892 = vpack.c.b16 %v865, %v864
        %v893 = vpack.c.b16 %v867, %v866
        %v894 = vpack.c.b16 %v869, %v868
        %v895 = vpack.c.b16 %v871, %v870
        %v896 = vpack.c.b16 %v873, %v872
        %v897 = vpack.c.b16 %v875, %v874
        %v898 = vpack.c.b16 %v877, %v876
        %v899 = vpack.c.b16 %v879, %v878
        %v921 = vsel %vm745, %v752, 0
        %923 = vmatprep.subr.bf16.mxu0 0
        %924 = vmatpush1.bf16.msra.mxu0 %v880
        %925 = vmatprep.subr.bf16.mxu0 0
        %926 = vmatpush1.bf16.msra.mxu0 %v881
        %927 = vmatprep.subr.bf16.mxu0 0
        %928 = vmatpush1.bf16.msra.mxu0 %v882
        %929 = vmatprep.subr.bf16.mxu0 0
        %930 = vmatpush1.bf16.msra.mxu0 %v883
        %931 = vmatprep.subr.bf16.mxu0 0
        %932 = vmatpush1.bf16.msra.mxu0 %v884
        %933 = vmatprep.subr.bf16.mxu0 0
        %934 = vmatpush1.bf16.msra.mxu0 %v885
        %935 = vmatprep.subr.bf16.mxu0 0
        %936 = vmatpush1.bf16.msra.mxu0 %v886
        %937 = vmatprep.subr.bf16.mxu0 0
        %938 = vmatpush1.bf16.msra.mxu0 %v887
        %939 = vmatprep.subr.bf16.mxu0 0
        %940 = vmatpush1.bf16.msra.mxu0 %v888
        %941 = vmatprep.subr.bf16.mxu0 0
        %942 = vmatpush1.bf16.msra.mxu0 %v889
        %943 = vmatprep.subr.bf16.mxu0 0
        %944 = vmatpush1.bf16.msra.mxu0 %v890
        %945 = vmatprep.subr.bf16.mxu0 0
        %946 = vmatpush1.bf16.msra.mxu0 %v891
        %947 = vmatprep.subr.bf16.mxu0 0
        %948 = vmatpush1.bf16.msra.mxu0 %v892
        %949 = vmatprep.subr.bf16.mxu0 0
        %950 = vmatpush1.bf16.msra.mxu0 %v893
        %951 = vmatprep.subr.bf16.mxu0 0
        %952 = vmatpush1.bf16.msra.mxu0 %v894
        %953 = vmatprep.subr.bf16.mxu0 0
        %954 = vmatpush1.bf16.msra.mxu0 %v895
        %955 = vmatprep.mubr.bf16.mxu0 %v751
        %956 = vmatmul.mubr.bf16.gmra.mrb[0].mxu0 %v750
        %v957 = vpop.f32.mrb[0].mxu0
        %v958 = vadd.f32 %v798, %v957
        %v959 = vpop.f32.mrb[0].mxu0
        %v960 = vpop.f32.mrb[0].mxu0
        %v961 = vadd.f32 %v798, %v960
        %v962 = vpop.f32.mrb[0].mxu0
        %963 = vdwg.mxu0
        %964 = vmatprep.subr.bf16.mxu0 0
        %965 = vmatpush1.bf16.msra.mxu0 %v896
        %966 = vmatprep.subr.bf16.mxu0 0
        %967 = vmatpush1.bf16.msra.mxu0 %v897
        %968 = vmatprep.subr.bf16.mxu0 0
        %969 = vmatpush1.bf16.msra.mxu0 %v898
        %970 = vmatprep.subr.bf16.mxu0 0
        %971 = vmatpush1.bf16.msra.mxu0 %v899
        %972 = vmatprep.subr.bf16.mxu0 0
        %973 = vmatpush1.bf16.msra.mxu0 0
        %974 = vmatprep.subr.bf16.mxu0 0
        %975 = vmatpush1.bf16.msra.mxu0 0
        %976 = vmatprep.subr.bf16.mxu0 0
        %977 = vmatpush1.bf16.msra.mxu0 0
        %978 = vmatprep.subr.bf16.mxu0 0
        %979 = vmatpush1.bf16.msra.mxu0 0
        %980 = vmatprep.subr.bf16.mxu0 0
        %981 = vmatpush1.bf16.msra.mxu0 0
        %982 = vmatprep.subr.bf16.mxu0 0
        %983 = vmatpush1.bf16.msra.mxu0 0
        %984 = vmatprep.subr.bf16.mxu0 0
        %985 = vmatpush1.bf16.msra.mxu0 0
        %986 = vmatprep.subr.bf16.mxu0 0
        %987 = vmatpush1.bf16.msra.mxu0 0
        %988 = vmatprep.subr.bf16.mxu0 0
        %989 = vmatpush1.bf16.msra.mxu0 0
        %990 = vmatprep.subr.bf16.mxu0 0
        %991 = vmatpush1.bf16.msra.mxu0 0
        %992 = vmatprep.subr.bf16.mxu0 0
        %993 = vmatpush1.bf16.msra.mxu0 0
        %994 = vmatprep.subr.bf16.mxu0 0
        %995 = vmatpush1.bf16.msra.mxu0 0
        %996 = vmatprep.mubr.bf16.mxu0 0
        %997 = vmatmul.mubr.bf16.gmra.mrb[0].mxu0 %v921
        %v998 = vpop.f32.mrb[0].mxu0
        %v999 = vadd.f32 %v958, %v998
        %v1000 = vpop.f32.mrb[0].mxu0
        %v1001 = vpop.f32.mrb[0].mxu0
        %v1002 = vadd.f32 %v961, %v1001
        %v1003 = vpop.f32.mrb[0].mxu0
        %1004 = vdwg.mxu0
        %v1005 = vtanh.pop %v999
        %v1006 = vtanh.pop %v1002
        %v1007 = vsub.f32 0.0, %v999
        %v1008 = vsub.f32 0.0, %v1002
        %v1009 = vmul.f32 %v1007, 1.442695
        %v1010 = vpow.pop %v1009
        %v1011 = vmul.f32 %v1008, 1.442695
        %v1012 = vpow.pop %v1011
        %v1013 = vadd.f32 %v1010, 1.0
        %v1014 = vadd.f32 %v1012, 1.0
        %v1015 = vrcp.pop %v1013
        %v1016 = vrcp.pop %v1014
        %1019 = vrot.lane.b32.xlu0 %v1015, 64
        %v1020 = vpop.permute.xlu0 %1019
        %1021 = vrot.lane.b32.xlu0 %v1016, 64
        %v1022 = vpop.permute.xlu0 %1021
        %v1025 = vmul.f32 %v1005, %v1020
        %v1026 = vmul.f32 %v1006, %v1022
        %v1027 = vpack.c.bf16 %v1026, %v1025
        %v1028 = vld [vmem:[#allocation15] sm:$0xf]
        %v1029 = vld [vmem:[#allocation15 + $0x4] sm:$0xf]
        %v1030 = vld [vmem:[#allocation15 + $0x8] sm:$0xf]
        %v1031 = vld [vmem:[#allocation15 + $0xc] sm:$0xf]
        %v1032 = vld [vmem:[#allocation15 + $0x10] sm:$0xf]
        %v1033 = vld [vmem:[#allocation15 + $0x14] sm:$0xf]
        %v1034 = vld [vmem:[#allocation15 + $0x18] sm:$0xf]
        %v1035 = vld [vmem:[#allocation15 + $0x1c] sm:$0xf]
        %v1036 = vld [vmem:[#allocation16] sm:$0x1]
        %v1038 = vlaneseq
        %v1039 = vshrl.u32 %v1038, 7
        %v1040 = vsub.s32 0, %v1039
        %v1041 = vrot.slane %v1036, %v1040
        %v1051 = vunpack.c.l.b16 %v1028
        %v1052 = vunpack.c.l.b16 %v1029
        %v1053 = vunpack.c.l.b16 %v1030
        %v1054 = vunpack.c.l.b16 %v1031
        %v1055 = vunpack.c.l.b16 %v1032
        %v1056 = vunpack.c.l.b16 %v1033
        %v1057 = vunpack.c.l.b16 %v1034
        %v1058 = vunpack.c.l.b16 %v1035
        %v1059 = vpack.c.b16 %v1052, %v1051
        %v1060 = vpack.c.b16 %v1054, %v1053
        %v1061 = vpack.c.b16 %v1056, %v1055
        %v1062 = vpack.c.b16 %v1058, %v1057
        %v1068 = vsel %vm745, %v1027, 0
        %1070 = vmatprep.subr.bf16.mxu0 0
        %1071 = vmatpush1.bf16.msra.mxu0 %v1059
        %1072 = vmatprep.subr.bf16.mxu0 0
        %1073 = vmatpush1.bf16.msra.mxu0 %v1060
        %1074 = vmatprep.subr.bf16.mxu0 0
        %1075 = vmatpush1.bf16.msra.mxu0 %v1061
        %1076 = vmatprep.subr.bf16.mxu0 0
        %1077 = vmatpush1.bf16.msra.mxu0 %v1062
        %1078 = vmatprep.subr.bf16.mxu0 0
        %1079 = vmatpush1.bf16.msra.mxu0 0
        %1080 = vmatprep.subr.bf16.mxu0 0
        %1081 = vmatpush1.bf16.msra.mxu0 0
        %1082 = vmatprep.subr.bf16.mxu0 0
        %1083 = vmatpush1.bf16.msra.mxu0 0
        %1084 = vmatprep.subr.bf16.mxu0 0
        %1085 = vmatpush1.bf16.msra.mxu0 0
        %1086 = vmatprep.subr.bf16.mxu0 0
        %1087 = vmatpush1.bf16.msra.mxu0 0
        %1088 = vmatprep.subr.bf16.mxu0 0
        %1089 = vmatpush1.bf16.msra.mxu0 0
        %1090 = vmatprep.subr.bf16.mxu0 0
        %1091 = vmatpush1.bf16.msra.mxu0 0
        %1092 = vmatprep.subr.bf16.mxu0 0
        %1093 = vmatpush1.bf16.msra.mxu0 0
        %1094 = vmatprep.subr.bf16.mxu0 0
        %1095 = vmatpush1.bf16.msra.mxu0 0
        %1096 = vmatprep.subr.bf16.mxu0 0
        %1097 = vmatpush1.bf16.msra.mxu0 0
        %1098 = vmatprep.subr.bf16.mxu0 0
        %1099 = vmatpush1.bf16.msra.mxu0 0
        %1100 = vmatprep.subr.bf16.mxu0 0
        %1101 = vmatpush1.bf16.msra.mxu0 0
        %1102 = vmatprep.mubr.bf16.mxu0 0
        %1103 = vmatmul.mubr.bf16.gmra.mrb[0].mxu0 %v1068
        %v1104 = vpop.f32.mrb[0].mxu0
        %v1105 = vadd.f32 %v1041, %v1104
        %v1106 = vpop.f32.mrb[0].mxu0
        %v1107 = vpop.f32.mrb[0].mxu0
        %v1108 = vadd.f32 %v1041, %v1107
        %v1109 = vpop.f32.mrb[0].mxu0
        %1110 = vdwg.mxu0
        %v1111 = vadd.f32 %v690, %v1105
        %v1112 = vadd.f32 %v691, %v1108
        %v1113 = vmul.f32 %v1111, %v617
        %v1114 = vmul.f32 %v1112, %v618
        %v1115 = vadd.f32 %v1105, 0.0
        %v1116 = vadd.f32 %v1108, 0.0
        %v1119 = vrot.slane %v1113, 6
        %v1120 = vrot.slane %v1114, 6
        %v1121 = vsel %vm694, %v1119, %v1120
        %v1125 = vsel %vm694, 0.0, %v1119
        %v1126 = vsel %vm694, %v1120, 0.0
        %v1129 = vrot.slane %v1125, 1
        %v1130 = vrot.slane %v1121, 1
        %v1131 = vsel %vm705, %v1129, %v1130
        %v1132 = vrot.slane %v1126, 1
        %v1133 = vsel %vm705, %v1130, %v1132
        %1134 = vrot.lane.b32.xlu0 %v1131, 64
        %v1135 = vpop.permute.xlu0 %1134
        %1136 = vrot.lane.b32.xlu0 %v1133, 64
        %v1137 = vpop.permute.xlu0 %1136
        %v1140 = vrot.slane %v1125, 2
        %v1141 = vrot.slane %v1121, 2
        %v1142 = vsel %vm717, %v1140, %v1141
        %v1143 = vrot.slane %v1126, 2
        %v1144 = vsel %vm717, %v1141, %v1143
        %v1147 = vrot.slane %v1125, 3
        %v1148 = vrot.slane %v1121, 3
        %v1149 = vsel %vm725, %v1147, %v1148
        %v1150 = vrot.slane %v1126, 3
        %v1151 = vsel %vm725, %v1148, %v1150
        %1152 = vrot.lane.b32.xlu0 %v1149, 64
        %v1153 = vpop.permute.xlu0 %1152
        %1154 = vrot.lane.b32.xlu0 %v1151, 64
        %v1155 = vpop.permute.xlu0 %1154
        %v1158 = vrot.slane %v1125, 4
        %v1159 = vrot.slane %v1121, 4
        %v1160 = vsel %vm737, %v1158, %v1159
        %v1161 = vrot.slane %v1126, 4
        %v1162 = vsel %vm737, %v1159, %v1161
        %v1165 = vsel %vm745, %v1125, %v1135
        %v1166 = vsel %vm745, %v1121, %v1137
        %v1167 = vsel %vm745, %v1142, %v1153
        %v1168 = vsel %vm745, %v1144, %v1155
        %v1169 = vpack.c.bf16 %v1166, %v1165
        %v1170 = vpack.c.bf16 %v1168, %v1167
        %v1171 = vpack.c.bf16 %v1162, %v1160
        %s1172 = scalar_lea.vmem [#allocation12], 160
        %v1173 = vld [vmem:[%s1172] sm:$0xf]
        %v1174 = vld [vmem:[%s1172 + $0x4] sm:$0xf]
        %v1175 = vld [vmem:[%s1172 + $0x8] sm:$0xf]
        %v1176 = vld [vmem:[%s1172 + $0xc] sm:$0xf]
        %v1177 = vld [vmem:[%s1172 + $0x10] sm:$0xf]
        %v1178 = vld [vmem:[%s1172 + $0x14] sm:$0xf]
        %v1179 = vld [vmem:[%s1172 + $0x18] sm:$0xf]
        %v1180 = vld [vmem:[%s1172 + $0x1c] sm:$0xf]
        %v1181 = vld [vmem:[%s1172 + $0x20] sm:$0xf]
        %v1182 = vld [vmem:[%s1172 + $0x24] sm:$0xf]
        %v1183 = vld [vmem:[%s1172 + $0x28] sm:$0xf]
        %v1184 = vld [vmem:[%s1172 + $0x2c] sm:$0xf]
        %v1185 = vld [vmem:[%s1172 + $0x30] sm:$0xf]
        %v1186 = vld [vmem:[%s1172 + $0x34] sm:$0xf]
        %v1187 = vld [vmem:[%s1172 + $0x38] sm:$0xf]
        %v1188 = vld [vmem:[%s1172 + $0x3c] sm:$0xf]
        %v1189 = vld [vmem:[%s1172 + $0x40] sm:$0xf]
        %v1190 = vld [vmem:[%s1172 + $0x44] sm:$0xf]
        %v1191 = vld [vmem:[%s1172 + $0x48] sm:$0xf]
        %v1192 = vld [vmem:[%s1172 + $0x4c] sm:$0xf]
        %v1193 = vld [vmem:[%s1172 + $0x50] sm:$0xf]
        %v1194 = vld [vmem:[%s1172 + $0x54] sm:$0xf]
        %v1195 = vld [vmem:[%s1172 + $0x58] sm:$0xf]
        %v1196 = vld [vmem:[%s1172 + $0x5c] sm:$0xf]
        %v1197 = vld [vmem:[%s1172 + $0x60] sm:$0xf]
        %v1198 = vld [vmem:[%s1172 + $0x64] sm:$0xf]
        %v1199 = vld [vmem:[%s1172 + $0x68] sm:$0xf]
        %v1200 = vld [vmem:[%s1172 + $0x6c] sm:$0xf]
        %v1201 = vld [vmem:[%s1172 + $0x70] sm:$0xf]
        %v1202 = vld [vmem:[%s1172 + $0x74] sm:$0xf]
        %v1203 = vld [vmem:[%s1172 + $0x78] sm:$0xf]
        %v1204 = vld [vmem:[%s1172 + $0x7c] sm:$0xf]
        %v1205 = vld [vmem:[%s1172 + $0x80] sm:$0xf]
        %v1206 = vld [vmem:[%s1172 + $0x84] sm:$0xf]
        %v1207 = vld [vmem:[%s1172 + $0x88] sm:$0xf]
        %v1208 = vld [vmem:[%s1172 + $0x8c] sm:$0xf]
        %v1209 = vld [vmem:[%s1172 + $0x90] sm:$0xf]
        %v1210 = vld [vmem:[%s1172 + $0x94] sm:$0xf]
        %v1211 = vld [vmem:[%s1172 + $0x98] sm:$0xf]
        %v1212 = vld [vmem:[%s1172 + $0x9c] sm:$0xf]
        %s1213 = scalar_lea.vmem [#allocation13], 1
        %v1214 = vld [vmem:[%s1213] sm:$0x1]
        %v1216 = vlaneseq
        %v1217 = vshrl.u32 %v1216, 7
        %v1218 = vsub.s32 0, %v1217
        %v1219 = vrot.slane %v1214, %v1218
        %v1261 = vunpack.c.l.b16 %v1173
        %v1262 = vunpack.c.l.b16 %v1174
        %v1263 = vunpack.c.l.b16 %v1175
        %v1264 = vunpack.c.l.b16 %v1176
        %v1265 = vunpack.c.l.b16 %v1177
        %v1266 = vunpack.c.l.b16 %v1178
        %v1267 = vunpack.c.l.b16 %v1179
        %v1268 = vunpack.c.l.b16 %v1180
        %v1269 = vunpack.c.l.b16 %v1181
        %v1270 = vunpack.c.l.b16 %v1182
        %v1271 = vunpack.c.l.b16 %v1183
        %v1272 = vunpack.c.l.b16 %v1184
        %v1273 = vunpack.c.l.b16 %v1185
        %v1274 = vunpack.c.l.b16 %v1186
        %v1275 = vunpack.c.l.b16 %v1187
        %v1276 = vunpack.c.l.b16 %v1188
        %v1277 = vunpack.c.l.b16 %v1189
        %v1278 = vunpack.c.l.b16 %v1190
        %v1279 = vunpack.c.l.b16 %v1191
        %v1280 = vunpack.c.l.b16 %v1192
        %v1281 = vunpack.c.l.b16 %v1193
        %v1282 = vunpack.c.l.b16 %v1194
        %v1283 = vunpack.c.l.b16 %v1195
        %v1284 = vunpack.c.l.b16 %v1196
        %v1285 = vunpack.c.l.b16 %v1197
        %v1286 = vunpack.c.l.b16 %v1198
        %v1287 = vunpack.c.l.b16 %v1199
        %v1288 = vunpack.c.l.b16 %v1200
        %v1289 = vunpack.c.l.b16 %v1201
        %v1290 = vunpack.c.l.b16 %v1202
        %v1291 = vunpack.c.l.b16 %v1203
        %v1292 = vunpack.c.l.b16 %v1204
        %v1293 = vunpack.c.l.b16 %v1205
        %v1294 = vunpack.c.l.b16 %v1206
        %v1295 = vunpack.c.l.b16 %v1207
        %v1296 = vunpack.c.l.b16 %v1208
        %v1297 = vunpack.c.l.b16 %v1209
        %v1298 = vunpack.c.l.b16 %v1210
        %v1299 = vunpack.c.l.b16 %v1211
        %v1300 = vunpack.c.l.b16 %v1212
        %v1301 = vpack.c.b16 %v1262, %v1261
        %v1302 = vpack.c.b16 %v1264, %v1263
        %v1303 = vpack.c.b16 %v1266, %v1265
        %v1304 = vpack.c.b16 %v1268, %v1267
        %v1305 = vpack.c.b16 %v1270, %v1269
        %v1306 = vpack.c.b16 %v1272, %v1271
        %v1307 = vpack.c.b16 %v1274, %v1273
        %v1308 = vpack.c.b16 %v1276, %v1275
        %v1309 = vpack.c.b16 %v1278, %v1277
        %v1310 = vpack.c.b16 %v1280, %v1279
        %v1311 = vpack.c.b16 %v1282, %v1281
        %v1312 = vpack.c.b16 %v1284, %v1283
        %v1313 = vpack.c.b16 %v1286, %v1285
        %v1314 = vpack.c.b16 %v1288, %v1287
        %v1315 = vpack.c.b16 %v1290, %v1289
        %v1316 = vpack.c.b16 %v1292, %v1291
        %v1317 = vpack.c.b16 %v1294, %v1293
        %v1318 = vpack.c.b16 %v1296, %v1295
        %v1319 = vpack.c.b16 %v1298, %v1297
        %v1320 = vpack.c.b16 %v1300, %v1299
        %v1342 = vsel %vm745, %v1171, 0
        %1344 = vmatprep.subr.bf16.mxu0 0
        %1345 = vmatpush1.bf16.msra.mxu0 %v1301
        %1346 = vmatprep.subr.bf16.mxu0 0
        %1347 = vmatpush1.bf16.msra.mxu0 %v1302
        %1348 = vmatprep.subr.bf16.mxu0 0
        %1349 = vmatpush1.bf16.msra.mxu0 %v1303
        %1350 = vmatprep.subr.bf16.mxu0 0
        %1351 = vmatpush1.bf16.msra.mxu0 %v1304
        %1352 = vmatprep.subr.bf16.mxu0 0
        %1353 = vmatpush1.bf16.msra.mxu0 %v1305
        %1354 = vmatprep.subr.bf16.mxu0 0
        %1355 = vmatpush1.bf16.msra.mxu0 %v1306
        %1356 = vmatprep.subr.bf16.mxu0 0
        %1357 = vmatpush1.bf16.msra.mxu0 %v1307
        %1358 = vmatprep.subr.bf16.mxu0 0
        %1359 = vmatpush1.bf16.msra.mxu0 %v1308
        %1360 = vmatprep.subr.bf16.mxu0 0
        %1361 = vmatpush1.bf16.msra.mxu0 %v1309
        %1362 = vmatprep.subr.bf16.mxu0 0
        %1363 = vmatpush1.bf16.msra.mxu0 %v1310
        %1364 = vmatprep.subr.bf16.mxu0 0
        %1365 = vmatpush1.bf16.msra.mxu0 %v1311
        %1366 = vmatprep.subr.bf16.mxu0 0
        %1367 = vmatpush1.bf16.msra.mxu0 %v1312
        %1368 = vmatprep.subr.bf16.mxu0 0
        %1369 = vmatpush1.bf16.msra.mxu0 %v1313
        %1370 = vmatprep.subr.bf16.mxu0 0
        %1371 = vmatpush1.bf16.msra.mxu0 %v1314
        %1372 = vmatprep.subr.bf16.mxu0 0
        %1373 = vmatpush1.bf16.msra.mxu0 %v1315
        %1374 = vmatprep.subr.bf16.mxu0 0
        %1375 = vmatpush1.bf16.msra.mxu0 %v1316
        %1376 = vmatprep.mubr.bf16.mxu0 %v1170
        %1377 = vmatmul.mubr.bf16.gmra.mrb[0].mxu0 %v1169
        %v1378 = vpop.f32.mrb[0].mxu0
        %v1379 = vadd.f32 %v1219, %v1378
        %v1380 = vpop.f32.mrb[0].mxu0
        %v1381 = vpop.f32.mrb[0].mxu0
        %v1382 = vadd.f32 %v1219, %v1381
        %v1383 = vpop.f32.mrb[0].mxu0
        %1384 = vdwg.mxu0
        %1385 = vmatprep.subr.bf16.mxu0 0
        %1386 = vmatpush1.bf16.msra.mxu0 %v1317
        %1387 = vmatprep.subr.bf16.mxu0 0
        %1388 = vmatpush1.bf16.msra.mxu0 %v1318
        %1389 = vmatprep.subr.bf16.mxu0 0
        %1390 = vmatpush1.bf16.msra.mxu0 %v1319
        %1391 = vmatprep.subr.bf16.mxu0 0
        %1392 = vmatpush1.bf16.msra.mxu0 %v1320
        %1393 = vmatprep.subr.bf16.mxu0 0
        %1394 = vmatpush1.bf16.msra.mxu0 0
        %1395 = vmatprep.subr.bf16.mxu0 0
        %1396 = vmatpush1.bf16.msra.mxu0 0
        %1397 = vmatprep.subr.bf16.mxu0 0
        %1398 = vmatpush1.bf16.msra.mxu0 0
        %1399 = vmatprep.subr.bf16.mxu0 0
        %1400 = vmatpush1.bf16.msra.mxu0 0
        %1401 = vmatprep.subr.bf16.mxu0 0
        %1402 = vmatpush1.bf16.msra.mxu0 0
        %1403 = vmatprep.subr.bf16.mxu0 0
        %1404 = vmatpush1.bf16.msra.mxu0 0
        %1405 = vmatprep.subr.bf16.mxu0 0
        %1406 = vmatpush1.bf16.msra.mxu0 0
        %1407 = vmatprep.subr.bf16.mxu0 0
        %1408 = vmatpush1.bf16.msra.mxu0 0
        %1409 = vmatprep.subr.bf16.mxu0 0
        %1410 = vmatpush1.bf16.msra.mxu0 0
        %1411 = vmatprep.subr.bf16.mxu0 0
        %1412 = vmatpush1.bf16.msra.mxu0 0
        %1413 = vmatprep.subr.bf16.mxu0 0
        %1414 = vmatpush1.bf16.msra.mxu0 0
        %1415 = vmatprep.subr.bf16.mxu0 0
        %1416 = vmatpush1.bf16.msra.mxu0 0
        %1417 = vmatprep.mubr.bf16.mxu0 0
        %1418 = vmatmul.mubr.bf16.gmra.mrb[0].mxu0 %v1342
        %v1419 = vpop.f32.mrb[0].mxu0
        %v1420 = vadd.f32 %v1379, %v1419
        %v1421 = vpop.f32.mrb[0].mxu0
        %v1422 = vpop.f32.mrb[0].mxu0
        %v1423 = vadd.f32 %v1382, %v1422
        %v1424 = vpop.f32.mrb[0].mxu0
        %1425 = vdwg.mxu0
        %v1426 = vtanh.pop %v1420
        %v1427 = vtanh.pop %v1423
        %v1428 = vsub.f32 0.0, %v1420
        %v1429 = vsub.f32 0.0, %v1423
        %v1430 = vmul.f32 %v1428, 1.442695
        %v1431 = vpow.pop %v1430
        %v1432 = vmul.f32 %v1429, 1.442695
        %v1433 = vpow.pop %v1432
        %v1434 = vadd.f32 %v1431, 1.0
        %v1435 = vadd.f32 %v1433, 1.0
        %v1436 = vrcp.pop %v1434
        %v1437 = vrcp.pop %v1435
        %1440 = vrot.lane.b32.xlu0 %v1436, 64
        %v1441 = vpop.permute.xlu0 %1440
        %1442 = vrot.lane.b32.xlu0 %v1437, 64
        %v1443 = vpop.permute.xlu0 %1442
        %v1446 = vmul.f32 %v1426, %v1441
        %v1447 = vmul.f32 %v1427, %v1443
        %v1448 = vpack.c.bf16 %v1447, %v1446
        %s1449 = scalar_lea.vmem [#allocation15], 32
        %v1450 = vld [vmem:[%s1449] sm:$0xf]
        %v1451 = vld [vmem:[%s1449 + $0x4] sm:$0xf]
        %v1452 = vld [vmem:[%s1449 + $0x8] sm:$0xf]
        %v1453 = vld [vmem:[%s1449 + $0xc] sm:$0xf]
        %v1454 = vld [vmem:[%s1449 + $0x10] sm:$0xf]
        %v1455 = vld [vmem:[%s1449 + $0x14] sm:$0xf]
        %v1456 = vld [vmem:[%s1449 + $0x18] sm:$0xf]
        %v1457 = vld [vmem:[%s1449 + $0x1c] sm:$0xf]
        %s1458 = scalar_lea.vmem [#allocation16], 1
        %v1459 = vld [vmem:[%s1458] sm:$0x1]
        %v1461 = vlaneseq
        %v1462 = vshrl.u32 %v1461, 7
        %v1463 = vsub.s32 0, %v1462
        %v1464 = vrot.slane %v1459, %v1463
        %v1474 = vunpack.c.l.b16 %v1450
        %v1475 = vunpack.c.l.b16 %v1451
        %v1476 = vunpack.c.l.b16 %v1452
        %v1477 = vunpack.c.l.b16 %v1453
        %v1478 = vunpack.c.l.b16 %v1454
        %v1479 = vunpack.c.l.b16 %v1455
        %v1480 = vunpack.c.l.b16 %v1456
        %v1481 = vunpack.c.l.b16 %v1457
        %v1482 = vpack.c.b16 %v1475, %v1474
        %v1483 = vpack.c.b16 %v1477, %v1476
        %v1484 = vpack.c.b16 %v1479, %v1478
        %v1485 = vpack.c.b16 %v1481, %v1480
        %v1491 = vsel %vm745, %v1448, 0
        %1493 = vmatprep.subr.bf16.mxu0 0
        %1494 = vmatpush1.bf16.msra.mxu0 %v1482
        %1495 = vmatprep.subr.bf16.mxu0 0
        %1496 = vmatpush1.bf16.msra.mxu0 %v1483
        %1497 = vmatprep.subr.bf16.mxu0 0
        %1498 = vmatpush1.bf16.msra.mxu0 %v1484
        %1499 = vmatprep.subr.bf16.mxu0 0
        %1500 = vmatpush1.bf16.msra.mxu0 %v1485
        %1501 = vmatprep.subr.bf16.mxu0 0
        %1502 = vmatpush1.bf16.msra.mxu0 0
        %1503 = vmatprep.subr.bf16.mxu0 0
        %1504 = vmatpush1.bf16.msra.mxu0 0
        %1505 = vmatprep.subr.bf16.mxu0 0
        %1506 = vmatpush1.bf16.msra.mxu0 0
        %1507 = vmatprep.subr.bf16.mxu0 0
        %1508 = vmatpush1.bf16.msra.mxu0 0
        %1509 = vmatprep.subr.bf16.mxu0 0
        %1510 = vmatpush1.bf16.msra.mxu0 0
        %1511 = vmatprep.subr.bf16.mxu0 0
        %1512 = vmatpush1.bf16.msra.mxu0 0
        %1513 = vmatprep.subr.bf16.mxu0 0
        %1514 = vmatpush1.bf16.msra.mxu0 0
        %1515 = vmatprep.subr.bf16.mxu0 0
        %1516 = vmatpush1.bf16.msra.mxu0 0
        %1517 = vmatprep.subr.bf16.mxu0 0
        %1518 = vmatpush1.bf16.msra.mxu0 0
        %1519 = vmatprep.subr.bf16.mxu0 0
        %1520 = vmatpush1.bf16.msra.mxu0 0
        %1521 = vmatprep.subr.bf16.mxu0 0
        %1522 = vmatpush1.bf16.msra.mxu0 0
        %1523 = vmatprep.subr.bf16.mxu0 0
        %1524 = vmatpush1.bf16.msra.mxu0 0
        %1525 = vmatprep.mubr.bf16.mxu0 0
        %1526 = vmatmul.mubr.bf16.gmra.mrb[0].mxu0 %v1491
        %v1527 = vpop.f32.mrb[0].mxu0
        %v1528 = vadd.f32 %v1464, %v1527
        %v1529 = vpop.f32.mrb[0].mxu0
        %v1530 = vpop.f32.mrb[0].mxu0
        %v1531 = vadd.f32 %v1464, %v1530
        %v1532 = vpop.f32.mrb[0].mxu0
        %1533 = vdwg.mxu0
        %v1534 = vadd.f32 %v1113, %v1528
        %v1535 = vadd.f32 %v1114, %v1531
        %v1536 = vmul.f32 %v1534, %v617
        %v1537 = vmul.f32 %v1535, %v618
        %v1538 = vadd.f32 %v1115, %v1528
        %v1539 = vadd.f32 %v1116, %v1531
        %v1542 = vrot.slane %v1536, 6
        %v1543 = vrot.slane %v1537, 6
        %v1544 = vsel %vm694, %v1542, %v1543
        %v1548 = vsel %vm694, 0.0, %v1542
        %v1549 = vsel %vm694, %v1543, 0.0
        %v1552 = vrot.slane %v1548, 1
        %v1553 = vrot.slane %v1544, 1
        %v1554 = vsel %vm705, %v1552, %v1553
        %v1555 = vrot.slane %v1549, 1
        %v1556 = vsel %vm705, %v1553, %v1555
        %1557 = vrot.lane.b32.xlu0 %v1554, 64
        %v1558 = vpop.permute.xlu0 %1557
        %1559 = vrot.lane.b32.xlu0 %v1556, 64
        %v1560 = vpop.permute.xlu0 %1559
        %v1563 = vrot.slane %v1548, 2
        %v1564 = vrot.slane %v1544, 2
        %v1565 = vsel %vm717, %v1563, %v1564
        %v1566 = vrot.slane %v1549, 2
        %v1567 = vsel %vm717, %v1564, %v1566
        %v1570 = vrot.slane %v1548, 3
        %v1571 = vrot.slane %v1544, 3
        %v1572 = vsel %vm725, %v1570, %v1571
        %v1573 = vrot.slane %v1549, 3
        %v1574 = vsel %vm725, %v1571, %v1573
        %1575 = vrot.lane.b32.xlu0 %v1572, 64
        %v1576 = vpop.permute.xlu0 %1575
        %1577 = vrot.lane.b32.xlu0 %v1574, 64
        %v1578 = vpop.permute.xlu0 %1577
        %v1581 = vrot.slane %v1548, 4
        %v1582 = vrot.slane %v1544, 4
        %v1583 = vsel %vm737, %v1581, %v1582
        %v1584 = vrot.slane %v1549, 4
        %v1585 = vsel %vm737, %v1582, %v1584
        %v1588 = vsel %vm745, %v1548, %v1558
        %v1589 = vsel %vm745, %v1544, %v1560
        %v1590 = vsel %vm745, %v1565, %v1576
        %v1591 = vsel %vm745, %v1567, %v1578
        %v1592 = vpack.c.bf16 %v1589, %v1588
        %v1593 = vpack.c.bf16 %v1591, %v1590
        %v1594 = vpack.c.bf16 %v1585, %v1583
        %s1595 = scalar_lea.vmem [#allocation12], 320
        %v1596 = vld [vmem:[%s1595] sm:$0xf]
        %v1597 = vld [vmem:[%s1595 + $0x4] sm:$0xf]
        %v1598 = vld [vmem:[%s1595 + $0x8] sm:$0xf]
        %v1599 = vld [vmem:[%s1595 + $0xc] sm:$0xf]
        %v1600 = vld [vmem:[%s1595 + $0x10] sm:$0xf]
        %v1601 = vld [vmem:[%s1595 + $0x14] sm:$0xf]
        %v1602 = vld [vmem:[%s1595 + $0x18] sm:$0xf]
        %v1603 = vld [vmem:[%s1595 + $0x1c] sm:$0xf]
        %v1604 = vld [vmem:[%s1595 + $0x20] sm:$0xf]
        %v1605 = vld [vmem:[%s1595 + $0x24] sm:$0xf]
        %v1606 = vld [vmem:[%s1595 + $0x28] sm:$0xf]
        %v1607 = vld [vmem:[%s1595 + $0x2c] sm:$0xf]
        %v1608 = vld [vmem:[%s1595 + $0x30] sm:$0xf]
        %v1609 = vld [vmem:[%s1595 + $0x34] sm:$0xf]
        %v1610 = vld [vmem:[%s1595 + $0x38] sm:$0xf]
        %v1611 = vld [vmem:[%s1595 + $0x3c] sm:$0xf]
        %v1612 = vld [vmem:[%s1595 + $0x40] sm:$0xf]
        %v1613 = vld [vmem:[%s1595 + $0x44] sm:$0xf]
        %v1614 = vld [vmem:[%s1595 + $0x48] sm:$0xf]
        %v1615 = vld [vmem:[%s1595 + $0x4c] sm:$0xf]
        %v1616 = vld [vmem:[%s1595 + $0x50] sm:$0xf]
        %v1617 = vld [vmem:[%s1595 + $0x54] sm:$0xf]
        %v1618 = vld [vmem:[%s1595 + $0x58] sm:$0xf]
        %v1619 = vld [vmem:[%s1595 + $0x5c] sm:$0xf]
        %v1620 = vld [vmem:[%s1595 + $0x60] sm:$0xf]
        %v1621 = vld [vmem:[%s1595 + $0x64] sm:$0xf]
        %v1622 = vld [vmem:[%s1595 + $0x68] sm:$0xf]
        %v1623 = vld [vmem:[%s1595 + $0x6c] sm:$0xf]
        %v1624 = vld [vmem:[%s1595 + $0x70] sm:$0xf]
        %v1625 = vld [vmem:[%s1595 + $0x74] sm:$0xf]
        %v1626 = vld [vmem:[%s1595 + $0x78] sm:$0xf]
        %v1627 = vld [vmem:[%s1595 + $0x7c] sm:$0xf]
        %v1628 = vld [vmem:[%s1595 + $0x80] sm:$0xf]
        %v1629 = vld [vmem:[%s1595 + $0x84] sm:$0xf]
        %v1630 = vld [vmem:[%s1595 + $0x88] sm:$0xf]
        %v1631 = vld [vmem:[%s1595 + $0x8c] sm:$0xf]
        %v1632 = vld [vmem:[%s1595 + $0x90] sm:$0xf]
        %v1633 = vld [vmem:[%s1595 + $0x94] sm:$0xf]
        %v1634 = vld [vmem:[%s1595 + $0x98] sm:$0xf]
        %v1635 = vld [vmem:[%s1595 + $0x9c] sm:$0xf]
        %s1636 = scalar_lea.vmem [#allocation13], 2
        %v1637 = vld [vmem:[%s1636] sm:$0x1]
        %v1639 = vlaneseq
        %v1640 = vshrl.u32 %v1639, 7
        %v1641 = vsub.s32 0, %v1640
        %v1642 = vrot.slane %v1637, %v1641
        %v1684 = vunpack.c.l.b16 %v1596
        %v1685 = vunpack.c.l.b16 %v1597
        %v1686 = vunpack.c.l.b16 %v1598
        %v1687 = vunpack.c.l.b16 %v1599
        %v1688 = vunpack.c.l.b16 %v1600
        %v1689 = vunpack.c.l.b16 %v1601
        %v1690 = vunpack.c.l.b16 %v1602
        %v1691 = vunpack.c.l.b16 %v1603
        %v1692 = vunpack.c.l.b16 %v1604
        %v1693 = vunpack.c.l.b16 %v1605
        %v1694 = vunpack.c.l.b16 %v1606
        %v1695 = vunpack.c.l.b16 %v1607
        %v1696 = vunpack.c.l.b16 %v1608
        %v1697 = vunpack.c.l.b16 %v1609
        %v1698 = vunpack.c.l.b16 %v1610
        %v1699 = vunpack.c.l.b16 %v1611
        %v1700 = vunpack.c.l.b16 %v1612
        %v1701 = vunpack.c.l.b16 %v1613
        %v1702 = vunpack.c.l.b16 %v1614
        %v1703 = vunpack.c.l.b16 %v1615
        %v1704 = vunpack.c.l.b16 %v1616
        %v1705 = vunpack.c.l.b16 %v1617
        %v1706 = vunpack.c.l.b16 %v1618
        %v1707 = vunpack.c.l.b16 %v1619
        %v1708 = vunpack.c.l.b16 %v1620
        %v1709 = vunpack.c.l.b16 %v1621
        %v1710 = vunpack.c.l.b16 %v1622
        %v1711 = vunpack.c.l.b16 %v1623
        %v1712 = vunpack.c.l.b16 %v1624
        %v1713 = vunpack.c.l.b16 %v1625
        %v1714 = vunpack.c.l.b16 %v1626
        %v1715 = vunpack.c.l.b16 %v1627
        %v1716 = vunpack.c.l.b16 %v1628
        %v1717 = vunpack.c.l.b16 %v1629
        %v1718 = vunpack.c.l.b16 %v1630
        %v1719 = vunpack.c.l.b16 %v1631
        %v1720 = vunpack.c.l.b16 %v1632
        %v1721 = vunpack.c.l.b16 %v1633
        %v1722 = vunpack.c.l.b16 %v1634
        %v1723 = vunpack.c.l.b16 %v1635
        %v1724 = vpack.c.b16 %v1685, %v1684
        %v1725 = vpack.c.b16 %v1687, %v1686
        %v1726 = vpack.c.b16 %v1689, %v1688
        %v1727 = vpack.c.b16 %v1691, %v1690
        %v1728 = vpack.c.b16 %v1693, %v1692
        %v1729 = vpack.c.b16 %v1695, %v1694
        %v1730 = vpack.c.b16 %v1697, %v1696
        %v1731 = vpack.c.b16 %v1699, %v1698
        %v1732 = vpack.c.b16 %v1701, %v1700
        %v1733 = vpack.c.b16 %v1703, %v1702
        %v1734 = vpack.c.b16 %v1705, %v1704
        %v1735 = vpack.c.b16 %v1707, %v1706
        %v1736 = vpack.c.b16 %v1709, %v1708
        %v1737 = vpack.c.b16 %v1711, %v1710
        %v1738 = vpack.c.b16 %v1713, %v1712
        %v1739 = vpack.c.b16 %v1715, %v1714
        %v1740 = vpack.c.b16 %v1717, %v1716
        %v1741 = vpack.c.b16 %v1719, %v1718
        %v1742 = vpack.c.b16 %v1721, %v1720
        %v1743 = vpack.c.b16 %v1723, %v1722
        %v1765 = vsel %vm745, %v1594, 0
        %1767 = vmatprep.subr.bf16.mxu0 0
        %1768 = vmatpush1.bf16.msra.mxu0 %v1724
        %1769 = vmatprep.subr.bf16.mxu0 0
        %1770 = vmatpush1.bf16.msra.mxu0 %v1725
        %1771 = vmatprep.subr.bf16.mxu0 0
        %1772 = vmatpush1.bf16.msra.mxu0 %v1726
        %1773 = vmatprep.subr.bf16.mxu0 0
        %1774 = vmatpush1.bf16.msra.mxu0 %v1727
        %1775 = vmatprep.subr.bf16.mxu0 0
        %1776 = vmatpush1.bf16.msra.mxu0 %v1728
        %1777 = vmatprep.subr.bf16.mxu0 0
        %1778 = vmatpush1.bf16.msra.mxu0 %v1729
        %1779 = vmatprep.subr.bf16.mxu0 0
        %1780 = vmatpush1.bf16.msra.mxu0 %v1730
        %1781 = vmatprep.subr.bf16.mxu0 0
        %1782 = vmatpush1.bf16.msra.mxu0 %v1731
        %1783 = vmatprep.subr.bf16.mxu0 0
        %1784 = vmatpush1.bf16.msra.mxu0 %v1732
        %1785 = vmatprep.subr.bf16.mxu0 0
        %1786 = vmatpush1.bf16.msra.mxu0 %v1733
        %1787 = vmatprep.subr.bf16.mxu0 0
        %1788 = vmatpush1.bf16.msra.mxu0 %v1734
        %1789 = vmatprep.subr.bf16.mxu0 0
        %1790 = vmatpush1.bf16.msra.mxu0 %v1735
        %1791 = vmatprep.subr.bf16.mxu0 0
        %1792 = vmatpush1.bf16.msra.mxu0 %v1736
        %1793 = vmatprep.subr.bf16.mxu0 0
        %1794 = vmatpush1.bf16.msra.mxu0 %v1737
        %1795 = vmatprep.subr.bf16.mxu0 0
        %1796 = vmatpush1.bf16.msra.mxu0 %v1738
        %1797 = vmatprep.subr.bf16.mxu0 0
        %1798 = vmatpush1.bf16.msra.mxu0 %v1739
        %1799 = vmatprep.mubr.bf16.mxu0 %v1593
        %1800 = vmatmul.mubr.bf16.gmra.mrb[0].mxu0 %v1592
        %v1801 = vpop.f32.mrb[0].mxu0
        %v1802 = vadd.f32 %v1642, %v1801
        %v1803 = vpop.f32.mrb[0].mxu0
        %v1804 = vpop.f32.mrb[0].mxu0
        %v1805 = vadd.f32 %v1642, %v1804
        %v1806 = vpop.f32.mrb[0].mxu0
        %1807 = vdwg.mxu0
        %1808 = vmatprep.subr.bf16.mxu0 0
        %1809 = vmatpush1.bf16.msra.mxu0 %v1740
        %1810 = vmatprep.subr.bf16.mxu0 0
        %1811 = vmatpush1.bf16.msra.mxu0 %v1741
        %1812 = vmatprep.subr.bf16.mxu0 0
        %1813 = vmatpush1.bf16.msra.mxu0 %v1742
        %1814 = vmatprep.subr.bf16.mxu0 0
        %1815 = vmatpush1.bf16.msra.mxu0 %v1743
        %1816 = vmatprep.subr.bf16.mxu0 0
        %1817 = vmatpush1.bf16.msra.mxu0 0
        %1818 = vmatprep.subr.bf16.mxu0 0
        %1819 = vmatpush1.bf16.msra.mxu0 0
        %1820 = vmatprep.subr.bf16.mxu0 0
        %1821 = vmatpush1.bf16.msra.mxu0 0
        %1822 = vmatprep.subr.bf16.mxu0 0
        %1823 = vmatpush1.bf16.msra.mxu0 0
        %1824 = vmatprep.subr.bf16.mxu0 0
        %1825 = vmatpush1.bf16.msra.mxu0 0
        %1826 = vmatprep.subr.bf16.mxu0 0
        %1827 = vmatpush1.bf16.msra.mxu0 0
        %1828 = vmatprep.subr.bf16.mxu0 0
        %1829 = vmatpush1.bf16.msra.mxu0 0
        %1830 = vmatprep.subr.bf16.mxu0 0
        %1831 = vmatpush1.bf16.msra.mxu0 0
        %1832 = vmatprep.subr.bf16.mxu0 0
        %1833 = vmatpush1.bf16.msra.mxu0 0
        %1834 = vmatprep.subr.bf16.mxu0 0
        %1835 = vmatpush1.bf16.msra.mxu0 0
        %1836 = vmatprep.subr.bf16.mxu0 0
        %1837 = vmatpush1.bf16.msra.mxu0 0
        %1838 = vmatprep.subr.bf16.mxu0 0
        %1839 = vmatpush1.bf16.msra.mxu0 0
        %1840 = vmatprep.mubr.bf16.mxu0 0
        %1841 = vmatmul.mubr.bf16.gmra.mrb[0].mxu0 %v1765
        %v1842 = vpop.f32.mrb[0].mxu0
        %v1843 = vadd.f32 %v1802, %v1842
        %v1844 = vpop.f32.mrb[0].mxu0
        %v1845 = vpop.f32.mrb[0].mxu0
        %v1846 = vadd.f32 %v1805, %v1845
        %v1847 = vpop.f32.mrb[0].mxu0
        %1848 = vdwg.mxu0
        %v1849 = vtanh.pop %v1843
        %v1850 = vtanh.pop %v1846
        %v1851 = vsub.f32 0.0, %v1843
        %v1852 = vsub.f32 0.0, %v1846
        %v1853 = vmul.f32 %v1851, 1.442695
        %v1854 = vpow.pop %v1853
        %v1855 = vmul.f32 %v1852, 1.442695
        %v1856 = vpow.pop %v1855
        %v1857 = vadd.f32 %v1854, 1.0
        %v1858 = vadd.f32 %v1856, 1.0
        %v1859 = vrcp.pop %v1857
        %v1860 = vrcp.pop %v1858
        %1863 = vrot.lane.b32.xlu0 %v1859, 64
        %v1864 = vpop.permute.xlu0 %1863
        %1865 = vrot.lane.b32.xlu0 %v1860, 64
        %v1866 = vpop.permute.xlu0 %1865
        %v1869 = vmul.f32 %v1849, %v1864
        %v1870 = vmul.f32 %v1850, %v1866
        %v1871 = vpack.c.bf16 %v1870, %v1869
        %s1872 = scalar_lea.vmem [#allocation15], 64
        %v1873 = vld [vmem:[%s1872] sm:$0xf]
        %v1874 = vld [vmem:[%s1872 + $0x4] sm:$0xf]
        %v1875 = vld [vmem:[%s1872 + $0x8] sm:$0xf]
        %v1876 = vld [vmem:[%s1872 + $0xc] sm:$0xf]
        %v1877 = vld [vmem:[%s1872 + $0x10] sm:$0xf]
        %v1878 = vld [vmem:[%s1872 + $0x14] sm:$0xf]
        %v1879 = vld [vmem:[%s1872 + $0x18] sm:$0xf]
        %v1880 = vld [vmem:[%s1872 + $0x1c] sm:$0xf]
        %s1881 = scalar_lea.vmem [#allocation16], 2
        %v1882 = vld [vmem:[%s1881] sm:$0x1]
        %v1884 = vlaneseq
        %v1885 = vshrl.u32 %v1884, 7
        %v1886 = vsub.s32 0, %v1885
        %v1887 = vrot.slane %v1882, %v1886
        %v1897 = vunpack.c.l.b16 %v1873
        %v1898 = vunpack.c.l.b16 %v1874
        %v1899 = vunpack.c.l.b16 %v1875
        %v1900 = vunpack.c.l.b16 %v1876
        %v1901 = vunpack.c.l.b16 %v1877
        %v1902 = vunpack.c.l.b16 %v1878
        %v1903 = vunpack.c.l.b16 %v1879
        %v1904 = vunpack.c.l.b16 %v1880
        %v1905 = vpack.c.b16 %v1898, %v1897
        %v1906 = vpack.c.b16 %v1900, %v1899
        %v1907 = vpack.c.b16 %v1902, %v1901
        %v1908 = vpack.c.b16 %v1904, %v1903
        %v1914 = vsel %vm745, %v1871, 0
        %1916 = vmatprep.subr.bf16.mxu0 0
        %1917 = vmatpush1.bf16.msra.mxu0 %v1905
        %1918 = vmatprep.subr.bf16.mxu0 0
        %1919 = vmatpush1.bf16.msra.mxu0 %v1906
        %1920 = vmatprep.subr.bf16.mxu0 0
        %1921 = vmatpush1.bf16.msra.mxu0 %v1907
        %1922 = vmatprep.subr.bf16.mxu0 0
        %1923 = vmatpush1.bf16.msra.mxu0 %v1908
        %1924 = vmatprep.subr.bf16.mxu0 0
        %1925 = vmatpush1.bf16.msra.mxu0 0
        %1926 = vmatprep.subr.bf16.mxu0 0
        %1927 = vmatpush1.bf16.msra.mxu0 0
        %1928 = vmatprep.subr.bf16.mxu0 0
        %1929 = vmatpush1.bf16.msra.mxu0 0
        %1930 = vmatprep.subr.bf16.mxu0 0
        %1931 = vmatpush1.bf16.msra.mxu0 0
        %1932 = vmatprep.subr.bf16.mxu0 0
        %1933 = vmatpush1.bf16.msra.mxu0 0
        %1934 = vmatprep.subr.bf16.mxu0 0
        %1935 = vmatpush1.bf16.msra.mxu0 0
        %1936 = vmatprep.subr.bf16.mxu0 0
        %1937 = vmatpush1.bf16.msra.mxu0 0
        %1938 = vmatprep.subr.bf16.mxu0 0
        %1939 = vmatpush1.bf16.msra.mxu0 0
        %1940 = vmatprep.subr.bf16.mxu0 0
        %1941 = vmatpush1.bf16.msra.mxu0 0
        %1942 = vmatprep.subr.bf16.mxu0 0
        %1943 = vmatpush1.bf16.msra.mxu0 0
        %1944 = vmatprep.subr.bf16.mxu0 0
        %1945 = vmatpush1.bf16.msra.mxu0 0
        %1946 = vmatprep.subr.bf16.mxu0 0
        %1947 = vmatpush1.bf16.msra.mxu0 0
        %1948 = vmatprep.mubr.bf16.mxu0 0
        %1949 = vmatmul.mubr.bf16.gmra.mrb[0].mxu0 %v1914
        %v1950 = vpop.f32.mrb[0].mxu0
        %v1951 = vadd.f32 %v1887, %v1950
        %v1952 = vpop.f32.mrb[0].mxu0
        %v1953 = vpop.f32.mrb[0].mxu0
        %v1954 = vadd.f32 %v1887, %v1953
        %v1955 = vpop.f32.mrb[0].mxu0
        %1956 = vdwg.mxu0
        %v1957 = vadd.f32 %v1536, %v1951
        %v1958 = vadd.f32 %v1537, %v1954
        %v1959 = vmul.f32 %v1957, %v617
        %v1960 = vmul.f32 %v1958, %v618
        %v1961 = vadd.f32 %v1538, %v1951
        %v1962 = vadd.f32 %v1539, %v1954
        %v1965 = vrot.slane %v1959, 6
        %v1966 = vrot.slane %v1960, 6
        %v1967 = vsel %vm694, %v1965, %v1966
        %v1971 = vsel %vm694, 0.0, %v1965
        %v1972 = vsel %vm694, %v1966, 0.0
        %v1975 = vrot.slane %v1971, 1
        %v1976 = vrot.slane %v1967, 1
        %v1977 = vsel %vm705, %v1975, %v1976
        %v1978 = vrot.slane %v1972, 1
        %v1979 = vsel %vm705, %v1976, %v1978
        %1980 = vrot.lane.b32.xlu0 %v1977, 64
        %v1981 = vpop.permute.xlu0 %1980
        %1982 = vrot.lane.b32.xlu0 %v1979, 64
        %v1983 = vpop.permute.xlu0 %1982
        %v1986 = vrot.slane %v1971, 2
        %v1987 = vrot.slane %v1967, 2
        %v1988 = vsel %vm717, %v1986, %v1987
        %v1989 = vrot.slane %v1972, 2
        %v1990 = vsel %vm717, %v1987, %v1989
        %v1993 = vrot.slane %v1971, 3
        %v1994 = vrot.slane %v1967, 3
        %v1995 = vsel %vm725, %v1993, %v1994
        %v1996 = vrot.slane %v1972, 3
        %v1997 = vsel %vm725, %v1994, %v1996
        %1998 = vrot.lane.b32.xlu0 %v1995, 64
        %v1999 = vpop.permute.xlu0 %1998
        %2000 = vrot.lane.b32.xlu0 %v1997, 64
        %v2001 = vpop.permute.xlu0 %2000
        %v2004 = vrot.slane %v1971, 4
        %v2005 = vrot.slane %v1967, 4
        %v2006 = vsel %vm737, %v2004, %v2005
        %v2007 = vrot.slane %v1972, 4
        %v2008 = vsel %vm737, %v2005, %v2007
        %v2011 = vsel %vm745, %v1971, %v1981
        %v2012 = vsel %vm745, %v1967, %v1983
        %v2013 = vsel %vm745, %v1988, %v1999
        %v2014 = vsel %vm745, %v1990, %v2001
        %v2015 = vpack.c.bf16 %v2012, %v2011
        %v2016 = vpack.c.bf16 %v2014, %v2013
        %v2017 = vpack.c.bf16 %v2008, %v2006
        %s2018 = scalar_lea.vmem [#allocation12], 480
        %v2019 = vld [vmem:[%s2018] sm:$0xf]
        %v2020 = vld [vmem:[%s2018 + $0x4] sm:$0xf]
        %v2021 = vld [vmem:[%s2018 + $0x8] sm:$0xf]
        %v2022 = vld [vmem:[%s2018 + $0xc] sm:$0xf]
        %v2023 = vld [vmem:[%s2018 + $0x10] sm:$0xf]
        %v2024 = vld [vmem:[%s2018 + $0x14] sm:$0xf]
        %v2025 = vld [vmem:[%s2018 + $0x18] sm:$0xf]
        %v2026 = vld [vmem:[%s2018 + $0x1c] sm:$0xf]
        %v2027 = vld [vmem:[%s2018 + $0x20] sm:$0xf]
        %v2028 = vld [vmem:[%s2018 + $0x24] sm:$0xf]
        %v2029 = vld [vmem:[%s2018 + $0x28] sm:$0xf]
        %v2030 = vld [vmem:[%s2018 + $0x2c] sm:$0xf]
        %v2031 = vld [vmem:[%s2018 + $0x30] sm:$0xf]
        %v2032 = vld [vmem:[%s2018 + $0x34] sm:$0xf]
        %v2033 = vld [vmem:[%s2018 + $0x38] sm:$0xf]
        %v2034 = vld [vmem:[%s2018 + $0x3c] sm:$0xf]
        %v2035 = vld [vmem:[%s2018 + $0x40] sm:$0xf]
        %v2036 = vld [vmem:[%s2018 + $0x44] sm:$0xf]
        %v2037 = vld [vmem:[%s2018 + $0x48] sm:$0xf]
        %v2038 = vld [vmem:[%s2018 + $0x4c] sm:$0xf]
        %v2039 = vld [vmem:[%s2018 + $0x50] sm:$0xf]
        %v2040 = vld [vmem:[%s2018 + $0x54] sm:$0xf]
        %v2041 = vld [vmem:[%s2018 + $0x58] sm:$0xf]
        %v2042 = vld [vmem:[%s2018 + $0x5c] sm:$0xf]
        %v2043 = vld [vmem:[%s2018 + $0x60] sm:$0xf]
        %v2044 = vld [vmem:[%s2018 + $0x64] sm:$0xf]
        %v2045 = vld [vmem:[%s2018 + $0x68] sm:$0xf]
        %v2046 = vld [vmem:[%s2018 + $0x6c] sm:$0xf]
        %v2047 = vld [vmem:[%s2018 + $0x70] sm:$0xf]
        %v2048 = vld [vmem:[%s2018 + $0x74] sm:$0xf]
        %v2049 = vld [vmem:[%s2018 + $0x78] sm:$0xf]
        %v2050 = vld [vmem:[%s2018 + $0x7c] sm:$0xf]
        %v2051 = vld [vmem:[%s2018 + $0x80] sm:$0xf]
        %v2052 = vld [vmem:[%s2018 + $0x84] sm:$0xf]
        %v2053 = vld [vmem:[%s2018 + $0x88] sm:$0xf]
        %v2054 = vld [vmem:[%s2018 + $0x8c] sm:$0xf]
        %v2055 = vld [vmem:[%s2018 + $0x90] sm:$0xf]
        %v2056 = vld [vmem:[%s2018 + $0x94] sm:$0xf]
        %v2057 = vld [vmem:[%s2018 + $0x98] sm:$0xf]
        %v2058 = vld [vmem:[%s2018 + $0x9c] sm:$0xf]
        %s2059 = scalar_lea.vmem [#allocation13], 3
        %v2060 = vld [vmem:[%s2059] sm:$0x1]
        %v2062 = vlaneseq
        %v2063 = vshrl.u32 %v2062, 7
        %v2064 = vsub.s32 0, %v2063
        %v2065 = vrot.slane %v2060, %v2064
        %v2107 = vunpack.c.l.b16 %v2019
        %v2108 = vunpack.c.l.b16 %v2020
        %v2109 = vunpack.c.l.b16 %v2021
        %v2110 = vunpack.c.l.b16 %v2022
        %v2111 = vunpack.c.l.b16 %v2023
        %v2112 = vunpack.c.l.b16 %v2024
        %v2113 = vunpack.c.l.b16 %v2025
        %v2114 = vunpack.c.l.b16 %v2026
        %v2115 = vunpack.c.l.b16 %v2027
        %v2116 = vunpack.c.l.b16 %v2028
        %v2117 = vunpack.c.l.b16 %v2029
        %v2118 = vunpack.c.l.b16 %v2030
        %v2119 = vunpack.c.l.b16 %v2031
        %v2120 = vunpack.c.l.b16 %v2032
        %v2121 = vunpack.c.l.b16 %v2033
        %v2122 = vunpack.c.l.b16 %v2034
        %v2123 = vunpack.c.l.b16 %v2035
        %v2124 = vunpack.c.l.b16 %v2036
        %v2125 = vunpack.c.l.b16 %v2037
        %v2126 = vunpack.c.l.b16 %v2038
        %v2127 = vunpack.c.l.b16 %v2039
        %v2128 = vunpack.c.l.b16 %v2040
        %v2129 = vunpack.c.l.b16 %v2041
        %v2130 = vunpack.c.l.b16 %v2042
        %v2131 = vunpack.c.l.b16 %v2043
        %v2132 = vunpack.c.l.b16 %v2044
        %v2133 = vunpack.c.l.b16 %v2045
        %v2134 = vunpack.c.l.b16 %v2046
        %v2135 = vunpack.c.l.b16 %v2047
        %v2136 = vunpack.c.l.b16 %v2048
        %v2137 = vunpack.c.l.b16 %v2049
        %v2138 = vunpack.c.l.b16 %v2050
        %v2139 = vunpack.c.l.b16 %v2051
        %v2140 = vunpack.c.l.b16 %v2052
        %v2141 = vunpack.c.l.b16 %v2053
        %v2142 = vunpack.c.l.b16 %v2054
        %v2143 = vunpack.c.l.b16 %v2055
        %v2144 = vunpack.c.l.b16 %v2056
        %v2145 = vunpack.c.l.b16 %v2057
        %v2146 = vunpack.c.l.b16 %v2058
        %v2147 = vpack.c.b16 %v2108, %v2107
        %v2148 = vpack.c.b16 %v2110, %v2109
        %v2149 = vpack.c.b16 %v2112, %v2111
        %v2150 = vpack.c.b16 %v2114, %v2113
        %v2151 = vpack.c.b16 %v2116, %v2115
        %v2152 = vpack.c.b16 %v2118, %v2117
        %v2153 = vpack.c.b16 %v2120, %v2119
        %v2154 = vpack.c.b16 %v2122, %v2121
        %v2155 = vpack.c.b16 %v2124, %v2123
        %v2156 = vpack.c.b16 %v2126, %v2125
        %v2157 = vpack.c.b16 %v2128, %v2127
        %v2158 = vpack.c.b16 %v2130, %v2129
        %v2159 = vpack.c.b16 %v2132, %v2131
        %v2160 = vpack.c.b16 %v2134, %v2133
        %v2161 = vpack.c.b16 %v2136, %v2135
        %v2162 = vpack.c.b16 %v2138, %v2137
        %v2163 = vpack.c.b16 %v2140, %v2139
        %v2164 = vpack.c.b16 %v2142, %v2141
        %v2165 = vpack.c.b16 %v2144, %v2143
        %v2166 = vpack.c.b16 %v2146, %v2145
        %v2188 = vsel %vm745, %v2017, 0
        %2190 = vmatprep.subr.bf16.mxu0 0
        %2191 = vmatpush1.bf16.msra.mxu0 %v2147
        %2192 = vmatprep.subr.bf16.mxu0 0
        %2193 = vmatpush1.bf16.msra.mxu0 %v2148
        %2194 = vmatprep.subr.bf16.mxu0 0
        %2195 = vmatpush1.bf16.msra.mxu0 %v2149
        %2196 = vmatprep.subr.bf16.mxu0 0
        %2197 = vmatpush1.bf16.msra.mxu0 %v2150
        %2198 = vmatprep.subr.bf16.mxu0 0
        %2199 = vmatpush1.bf16.msra.mxu0 %v2151
        %2200 = vmatprep.subr.bf16.mxu0 0
        %2201 = vmatpush1.bf16.msra.mxu0 %v2152
        %2202 = vmatprep.subr.bf16.mxu0 0
        %2203 = vmatpush1.bf16.msra.mxu0 %v2153
        %2204 = vmatprep.subr.bf16.mxu0 0
        %2205 = vmatpush1.bf16.msra.mxu0 %v2154
        %2206 = vmatprep.subr.bf16.mxu0 0
        %2207 = vmatpush1.bf16.msra.mxu0 %v2155
        %2208 = vmatprep.subr.bf16.mxu0 0
        %2209 = vmatpush1.bf16.msra.mxu0 %v2156
        %2210 = vmatprep.subr.bf16.mxu0 0
        %2211 = vmatpush1.bf16.msra.mxu0 %v2157
        %2212 = vmatprep.subr.bf16.mxu0 0
        %2213 = vmatpush1.bf16.msra.mxu0 %v2158
        %2214 = vmatprep.subr.bf16.mxu0 0
        %2215 = vmatpush1.bf16.msra.mxu0 %v2159
        %2216 = vmatprep.subr.bf16.mxu0 0
        %2217 = vmatpush1.bf16.msra.mxu0 %v2160
        %2218 = vmatprep.subr.bf16.mxu0 0
        %2219 = vmatpush1.bf16.msra.mxu0 %v2161
        %2220 = vmatprep.subr.bf16.mxu0 0
        %2221 = vmatpush1.bf16.msra.mxu0 %v2162
        %2222 = vmatprep.mubr.bf16.mxu0 %v2016
        %2223 = vmatmul.mubr.bf16.gmra.mrb[0].mxu0 %v2015
        %v2224 = vpop.f32.mrb[0].mxu0
        %v2225 = vadd.f32 %v2065, %v2224
        %v2226 = vpop.f32.mrb[0].mxu0
        %v2227 = vpop.f32.mrb[0].mxu0
        %v2228 = vadd.f32 %v2065, %v2227
        %v2229 = vpop.f32.mrb[0].mxu0
        %2230 = vdwg.mxu0
        %2231 = vmatprep.subr.bf16.mxu0 0
        %2232 = vmatpush1.bf16.msra.mxu0 %v2163
        %2233 = vmatprep.subr.bf16.mxu0 0
        %2234 = vmatpush1.bf16.msra.mxu0 %v2164
        %2235 = vmatprep.subr.bf16.mxu0 0
        %2236 = vmatpush1.bf16.msra.mxu0 %v2165
        %2237 = vmatprep.subr.bf16.mxu0 0
        %2238 = vmatpush1.bf16.msra.mxu0 %v2166
        %2239 = vmatprep.subr.bf16.mxu0 0
        %2240 = vmatpush1.bf16.msra.mxu0 0
        %2241 = vmatprep.subr.bf16.mxu0 0
        %2242 = vmatpush1.bf16.msra.mxu0 0
        %2243 = vmatprep.subr.bf16.mxu0 0
        %2244 = vmatpush1.bf16.msra.mxu0 0
        %2245 = vmatprep.subr.bf16.mxu0 0
        %2246 = vmatpush1.bf16.msra.mxu0 0
        %2247 = vmatprep.subr.bf16.mxu0 0
        %2248 = vmatpush1.bf16.msra.mxu0 0
        %2249 = vmatprep.subr.bf16.mxu0 0
        %2250 = vmatpush1.bf16.msra.mxu0 0
        %2251 = vmatprep.subr.bf16.mxu0 0
        %2252 = vmatpush1.bf16.msra.mxu0 0
        %2253 = vmatprep.subr.bf16.mxu0 0
        %2254 = vmatpush1.bf16.msra.mxu0 0
        %2255 = vmatprep.subr.bf16.mxu0 0
        %2256 = vmatpush1.bf16.msra.mxu0 0
        %2257 = vmatprep.subr.bf16.mxu0 0
        %2258 = vmatpush1.bf16.msra.mxu0 0
        %2259 = vmatprep.subr.bf16.mxu0 0
        %2260 = vmatpush1.bf16.msra.mxu0 0
        %2261 = vmatprep.subr.bf16.mxu0 0
        %2262 = vmatpush1.bf16.msra.mxu0 0
        %2263 = vmatprep.mubr.bf16.mxu0 0
        %2264 = vmatmul.mubr.bf16.gmra.mrb[0].mxu0 %v2188
        %v2265 = vpop.f32.mrb[0].mxu0
        %v2266 = vadd.f32 %v2225, %v2265
        %v2267 = vpop.f32.mrb[0].mxu0
        %v2268 = vpop.f32.mrb[0].mxu0
        %v2269 = vadd.f32 %v2228, %v2268
        %v2270 = vpop.f32.mrb[0].mxu0
        %2271 = vdwg.mxu0
        %v2272 = vtanh.pop %v2266
        %v2273 = vtanh.pop %v2269
        %v2274 = vsub.f32 0.0, %v2266
        %v2275 = vsub.f32 0.0, %v2269
        %v2276 = vmul.f32 %v2274, 1.442695
        %v2277 = vpow.pop %v2276
        %v2278 = vmul.f32 %v2275, 1.442695
        %v2279 = vpow.pop %v2278
        %v2280 = vadd.f32 %v2277, 1.0
        %v2281 = vadd.f32 %v2279, 1.0
        %v2282 = vrcp.pop %v2280
        %v2283 = vrcp.pop %v2281
        %2286 = vrot.lane.b32.xlu0 %v2282, 64
        %v2287 = vpop.permute.xlu0 %2286
        %2288 = vrot.lane.b32.xlu0 %v2283, 64
        %v2289 = vpop.permute.xlu0 %2288
        %v2292 = vmul.f32 %v2272, %v2287
        %v2293 = vmul.f32 %v2273, %v2289
        %v2294 = vpack.c.bf16 %v2293, %v2292
        %s2295 = scalar_lea.vmem [#allocation15], 96
        %v2296 = vld [vmem:[%s2295] sm:$0xf]
        %v2297 = vld [vmem:[%s2295 + $0x4] sm:$0xf]
        %v2298 = vld [vmem:[%s2295 + $0x8] sm:$0xf]
        %v2299 = vld [vmem:[%s2295 + $0xc] sm:$0xf]
        %v2300 = vld [vmem:[%s2295 + $0x10] sm:$0xf]
        %v2301 = vld [vmem:[%s2295 + $0x14] sm:$0xf]
        %v2302 = vld [vmem:[%s2295 + $0x18] sm:$0xf]
        %v2303 = vld [vmem:[%s2295 + $0x1c] sm:$0xf]
        %s2304 = scalar_lea.vmem [#allocation16], 3
        %v2305 = vld [vmem:[%s2304] sm:$0x1]
        %v2307 = vlaneseq
        %v2308 = vshrl.u32 %v2307, 7
        %v2309 = vsub.s32 0, %v2308
        %v2310 = vrot.slane %v2305, %v2309
        %v2320 = vunpack.c.l.b16 %v2296
        %v2321 = vunpack.c.l.b16 %v2297
        %v2322 = vunpack.c.l.b16 %v2298
        %v2323 = vunpack.c.l.b16 %v2299
        %v2324 = vunpack.c.l.b16 %v2300
        %v2325 = vunpack.c.l.b16 %v2301
        %v2326 = vunpack.c.l.b16 %v2302
        %v2327 = vunpack.c.l.b16 %v2303
        %v2328 = vpack.c.b16 %v2321, %v2320
        %v2329 = vpack.c.b16 %v2323, %v2322
        %v2330 = vpack.c.b16 %v2325, %v2324
        %v2331 = vpack.c.b16 %v2327, %v2326
        %v2337 = vsel %vm745, %v2294, 0
        %2339 = vmatprep.subr.bf16.mxu0 0
        %2340 = vmatpush1.bf16.msra.mxu0 %v2328
        %2341 = vmatprep.subr.bf16.mxu0 0
        %2342 = vmatpush1.bf16.msra.mxu0 %v2329
        %2343 = vmatprep.subr.bf16.mxu0 0
        %2344 = vmatpush1.bf16.msra.mxu0 %v2330
        %2345 = vmatprep.subr.bf16.mxu0 0
        %2346 = vmatpush1.bf16.msra.mxu0 %v2331
        %2347 = vmatprep.subr.bf16.mxu0 0
        %2348 = vmatpush1.bf16.msra.mxu0 0
        %2349 = vmatprep.subr.bf16.mxu0 0
        %2350 = vmatpush1.bf16.msra.mxu0 0
        %2351 = vmatprep.subr.bf16.mxu0 0
        %2352 = vmatpush1.bf16.msra.mxu0 0
        %2353 = vmatprep.subr.bf16.mxu0 0
        %2354 = vmatpush1.bf16.msra.mxu0 0
        %2355 = vmatprep.subr.bf16.mxu0 0
        %2356 = vmatpush1.bf16.msra.mxu0 0
        %2357 = vmatprep.subr.bf16.mxu0 0
        %2358 = vmatpush1.bf16.msra.mxu0 0
        %2359 = vmatprep.subr.bf16.mxu0 0
        %2360 = vmatpush1.bf16.msra.mxu0 0
        %2361 = vmatprep.subr.bf16.mxu0 0
        %2362 = vmatpush1.bf16.msra.mxu0 0
        %2363 = vmatprep.subr.bf16.mxu0 0
        %2364 = vmatpush1.bf16.msra.mxu0 0
        %2365 = vmatprep.subr.bf16.mxu0 0
        %2366 = vmatpush1.bf16.msra.mxu0 0
        %2367 = vmatprep.subr.bf16.mxu0 0
        %2368 = vmatpush1.bf16.msra.mxu0 0
        %2369 = vmatprep.subr.bf16.mxu0 0
        %2370 = vmatpush1.bf16.msra.mxu0 0
        %2371 = vmatprep.mubr.bf16.mxu0 0
        %2372 = vmatmul.mubr.bf16.gmra.mrb[0].mxu0 %v2337
        %v2373 = vpop.f32.mrb[0].mxu0
        %v2374 = vadd.f32 %v2310, %v2373
        %v2375 = vpop.f32.mrb[0].mxu0
        %v2376 = vpop.f32.mrb[0].mxu0
        %v2377 = vadd.f32 %v2310, %v2376
        %v2378 = vpop.f32.mrb[0].mxu0
        %2379 = vdwg.mxu0
        %v2380 = vadd.f32 %v1961, %v2374
        %v2381 = vadd.f32 %v1962, %v2377
        %v2382 = vmul.f32 %v2380, %v617
        %v2383 = vmul.f32 %v2381, %v618
        %v2384 = vpack.c.bf16 %v2383, %v2382
        %v2385 = vld [vmem:[#allocation18] sm:$0xf]
        %v2386 = vld [vmem:[#allocation18 + $0x4] sm:$0xf]
        %v2387 = vld [vmem:[#allocation18 + $0x8] sm:$0xf]
        %v2388 = vld [vmem:[#allocation18 + $0xc] sm:$0xf]
        %v2389 = vld [vmem:[#allocation18 + $0x10] sm:$0xf]
        %v2390 = vld [vmem:[#allocation18 + $0x14] sm:$0xf]
        %v2391 = vld [vmem:[#allocation18 + $0x18] sm:$0xf]
        %v2392 = vld [vmem:[#allocation18 + $0x1c] sm:$0xf]
        %v2393 = vld [vmem:[#allocation19] sm:$0x1]
        %v2395 = vlaneseq
        %v2396 = vshrl.u32 %v2395, 7
        %v2397 = vsub.s32 0, %v2396
        %v2398 = vrot.slane %v2393, %v2397
        %2401 = vrot.lane.b32.xlu0 %v2384, 64
        %v2402 = vpop.permute.xlu0 %2401
        %v2411 = vunpack.c.l.b16 %v2385
        %v2412 = vunpack.c.l.b16 %v2386
        %v2413 = vunpack.c.l.b16 %v2387
        %v2414 = vunpack.c.l.b16 %v2388
        %v2415 = vunpack.c.l.b16 %v2389
        %v2416 = vunpack.c.l.b16 %v2390
        %v2417 = vunpack.c.l.b16 %v2391
        %v2418 = vunpack.c.l.b16 %v2392
        %v2419 = vpack.c.b16 %v2412, %v2411
        %v2420 = vpack.c.b16 %v2414, %v2413
        %v2421 = vpack.c.b16 %v2416, %v2415
        %v2422 = vpack.c.b16 %v2418, %v2417
        %v2428 = vsel %vm745, %v2402, 0
        %2430 = vmatprep.subr.bf16.mxu0 0
        %2431 = vmatpush1.bf16.msra.mxu0 %v2419
        %2432 = vmatprep.subr.bf16.mxu0 0
        %2433 = vmatpush1.bf16.msra.mxu0 %v2420
        %2434 = vmatprep.subr.bf16.mxu0 0
        %2435 = vmatpush1.bf16.msra.mxu0 %v2421
        %2436 = vmatprep.subr.bf16.mxu0 0
        %2437 = vmatpush1.bf16.msra.mxu0 %v2422
        %2438 = vmatprep.subr.bf16.mxu0 0
        %2439 = vmatpush1.bf16.msra.mxu0 0
        %2440 = vmatprep.subr.bf16.mxu0 0
        %2441 = vmatpush1.bf16.msra.mxu0 0
        %2442 = vmatprep.subr.bf16.mxu0 0
        %2443 = vmatpush1.bf16.msra.mxu0 0
        %2444 = vmatprep.subr.bf16.mxu0 0
        %2445 = vmatpush1.bf16.msra.mxu0 0
        %2446 = vmatprep.subr.bf16.mxu0 0
        %2447 = vmatpush1.bf16.msra.mxu0 0
        %2448 = vmatprep.subr.bf16.mxu0 0
        %2449 = vmatpush1.bf16.msra.mxu0 0
        %2450 = vmatprep.subr.bf16.mxu0 0
        %2451 = vmatpush1.bf16.msra.mxu0 0
        %2452 = vmatprep.subr.bf16.mxu0 0
        %2453 = vmatpush1.bf16.msra.mxu0 0
        %2454 = vmatprep.subr.bf16.mxu0 0
        %2455 = vmatpush1.bf16.msra.mxu0 0
        %2456 = vmatprep.subr.bf16.mxu0 0
        %2457 = vmatpush1.bf16.msra.mxu0 0
        %2458 = vmatprep.subr.bf16.mxu0 0
        %2459 = vmatpush1.bf16.msra.mxu0 0
        %2460 = vmatprep.subr.bf16.mxu0 0
        %2461 = vmatpush1.bf16.msra.mxu0 0
        %2462 = vmatprep.mubr.bf16.mxu0 0
        %2463 = vmatmul.mubr.bf16.gmra.mrb[0].mxu0 %v2428
        %v2464 = vpop.f32.mrb[0].mxu0
        %v2465 = vadd.f32 %v2398, %v2464
        %v2466 = vpop.f32.mrb[0].mxu0
        %v2467 = vpop.f32.mrb[0].mxu0
        %v2468 = vadd.f32 %v2398, %v2467
        %v2469 = vpop.f32.mrb[0].mxu0
        %2470 = vdwg.mxu0
        %v2471 = vmul.f32 %v2465, %v617
        %v2472 = vmul.f32 %v2468, %v618
        %v2473 = vld [vmem:[%s519] sm:$0xff]
        %v2474 = vld [vmem:[%s519 + $0x8] sm:$0xff]
        %v2475 = vmul.f32 %v2471, 1.442695
        %v2476 = vpow.pop %v2475
        %v2477 = vmul.f32 %v2472, 1.442695
        %v2478 = vpow.pop %v2477
        %2481 = vrot.lane.b32.xlu0 %v2476, 96
        %v2482 = vpop.permute.xlu0 %2481
        %2483 = vrot.lane.b32.xlu0 %v2478, 96
        %v2484 = vpop.permute.xlu0 %2483
        %v2487 = vmul.f32 %v2473, %v2482
        %v2488 = vmul.f32 %v2474, %v2484
        %v2489 = vadd.f32 %v2471, %v2487
        %v2490 = vadd.f32 %v2472, %v2488
        %v2491 = vmul.f32 %v2489, %v617
        %v2492 = vmul.f32 %v2490, %v618
        %2493 = vst.msk [vmem:[%s592] sm:$0xff] %vm645, %v2491
        %2494 = vst.msk [vmem:[%s592 + $0x8] sm:$0xff] %vm645, %v2492
        %2495 = vst.msk [vmem:[%s599] sm:$0xff] %vm645, %v2471
        %2496 = vst.msk [vmem:[%s599 + $0x8] sm:$0xff] %vm645, %v2472
        %2499 = vrot.lane.b32.xlu0 %v2471, 96
        %v2500 = vpop.permute.xlu0 %2499
        %2501 = vrot.lane.b32.xlu0 %v2472, 96
        %v2502 = vpop.permute.xlu0 %2501
        %2505 = vst.msk [vmem:[%s606] sm:$0xff] %vm645, %v2500
        %2506 = vst.msk [vmem:[%s606 + $0x8] sm:$0xff] %vm645, %v2502
        %s2507 = sand.u32 %s273, 1
        %s2508 = scalar_lea.sflag [#allocation6], %s2507
        %s2509 = sand.u32 %s273, 1
        %s2510 = smul.addr %s2509, 16
        %s2511 = scalar_lea.vmem [#allocation21], %s2510
        %s2512 = sand.u32 %s45, 1
        %s2513 = scalar_lea.sflag [#allocation23], %s2512
        %s2514 = sand.u32 %s299, 1
        %s2515 = smul.addr %s2514, 16
        %s2516 = scalar_lea.vmem [#allocation22], %s2515
        %s2517 = sand.u32 %s45, 1
        %s2518 = scalar_lea.sflag [#allocation23], %s2517
        %s2519 = sand.u32 %s325, 1
        %s2520 = smul.addr %s2519, 16
        %s2521 = scalar_lea.vmem [#allocation24], %s2520
        // Predicated region
        $region101: #{posterior_encoder_forward.1} parent=59 // pred_check
          %p2522 = pneg %p283
        $region102: #{posterior_encoder_forward.1} parent=59 // pred_check_branch
          %2524 = sbr.rel (%p2522) target = $region104
        $region103: #{posterior_encoder_forward.1} parent=59 // pred_region
          %s2526 = ssub.s32 256, 256
          %2527 = vsyncadd %s2508, %s2526
          %s2528 = smul.addr %s45, 2
          %s2529 = smul.addr %s2528, 128
          %s2530 = scalar_lea.hbm %s11, %s2529
          %s2531 = sshll.u32 %s2511, 4
          %s2532 = int_to_ptr.vmem [resolvable:$true] %s2531
          %2537 = dma.vmem_to_hbm [thread:$0]  %s2532, 256, %s2530, %s2508, 128, 128, 8
        $region104: #{posterior_encoder_forward.1} parent=59 // pred_fallthru
          _
        // Predicated region
        $region105: #{posterior_encoder_forward.1} parent=59 // pred_check
          %p2538 = pneg %p309
        $region106: #{posterior_encoder_forward.1} parent=59 // pred_check_branch
          %2540 = sbr.rel (%p2538) target = $region108
        $region107: #{posterior_encoder_forward.1} parent=59 // pred_region
          %s2542 = ssub.s32 256, 256
          %2543 = vsyncadd %s2513, %s2542
          %s2544 = smul.addr %s45, 2
          %s2545 = smul.addr %s2544, 128
          %s2546 = scalar_lea.hbm %s12, %s2545
          %s2547 = sshll.u32 %s2516, 4
          %s2548 = int_to_ptr.vmem [resolvable:$true] %s2547
          %2553 = dma.vmem_to_hbm [thread:$0]  %s2548, 256, %s2546, %s2513, 128, 128, 8
        $region108: #{posterior_encoder_forward.1} parent=59 // pred_fallthru
          _
        // Predicated region
        $region109: #{posterior_encoder_forward.1} parent=59 // pred_check
          %p2554 = pneg %p335
        $region110: #{posterior_encoder_forward.1} parent=59 // pred_check_branch
          %2556 = sbr.rel (%p2554) target = $region112
        $region111: #{posterior_encoder_forward.1} parent=59 // pred_region
          %s2558 = ssub.s32 256, 256
          %2559 = vsyncadd %s2518, %s2558
          %s2560 = smul.addr %s45, 2
          %s2561 = smul.addr %s2560, 128
          %s2562 = scalar_lea.hbm %s13, %s2561
          %s2563 = sshll.u32 %s2521, 4
          %s2564 = int_to_ptr.vmem [resolvable:$true] %s2563
          %2569 = dma.vmem_to_hbm [thread:$0]  %s2564, 256, %s2562, %s2518, 128, 128, 8
        $region112: #{posterior_encoder_forward.1} parent=59 // pred_fallthru
          _
      $region60: #{posterior_encoder_forward.1} parent=5 // pred_fallthru
        _
      %p2570 = scmp.le.s32.totalorder 2, %s40
      // Predicated region
      $region113: #{posterior_encoder_forward.1} parent=5 // pred_check
        %p2571 = pneg %p2570
      $region114: #{posterior_encoder_forward.1} parent=5 // pred_check_branch
        %2573 = sbr.rel (%p2571) target = $region116
      $region115: #{posterior_encoder_forward.1} parent=5 // pred_region
        %s2574 = ssub.s32 %s40, 2
        // Predicated region
        $region117: #{posterior_encoder_forward.1} parent=115 // pred_check
          %p2575 = pneg %p289
        $region118: #{posterior_encoder_forward.1} parent=115 // pred_check_branch
          %2577 = sbr.rel (%p2575) target = $region120
        $region119: #{posterior_encoder_forward.1} parent=115 // pred_region
          %s2578 = sand.u32 %s274, 1
          %s2579 = scalar_lea.sflag [#allocation6], %s2578
          %s2580 = sand.u32 %s274, 1
          %s2581 = smul.addr %s2580, 16
          %s2582 = scalar_lea.vmem [#allocation21], %s2581
          %2583 = dma.done %s2579, 256
        $region120: #{posterior_encoder_forward.1} parent=115 // pred_fallthru
          _
        // Predicated region
        $region121: #{posterior_encoder_forward.1} parent=115 // pred_check
          %p2584 = pneg %p315
        $region122: #{posterior_encoder_forward.1} parent=115 // pred_check_branch
          %2586 = sbr.rel (%p2584) target = $region124
        $region123: #{posterior_encoder_forward.1} parent=115 // pred_region
          %s2587 = sand.u32 %s46, 1
          %s2588 = scalar_lea.sflag [#allocation23], %s2587
          %s2589 = sand.u32 %s300, 1
          %s2590 = smul.addr %s2589, 16
          %s2591 = scalar_lea.vmem [#allocation22], %s2590
          %2592 = dma.done %s2588, 256
        $region124: #{posterior_encoder_forward.1} parent=115 // pred_fallthru
          _
        // Predicated region
        $region125: #{posterior_encoder_forward.1} parent=115 // pred_check
          %p2593 = pneg %p341
        $region126: #{posterior_encoder_forward.1} parent=115 // pred_check_branch
          %2595 = sbr.rel (%p2593) target = $region128
        $region127: #{posterior_encoder_forward.1} parent=115 // pred_region
          %s2596 = sand.u32 %s46, 1
          %s2597 = scalar_lea.sflag [#allocation23], %s2596
          %s2598 = sand.u32 %s326, 1
          %s2599 = smul.addr %s2598, 16
          %s2600 = scalar_lea.vmem [#allocation24], %s2599
          %2601 = dma.done %s2597, 256
        $region128: #{posterior_encoder_forward.1} parent=115 // pred_fallthru
          _
      $region116: #{posterior_encoder_forward.1} parent=5 // pred_fallthru
        _
    $region6: #{posterior_encoder_forward.1} parent=1 // loop_footer
      %s44 = sadd.s32 1, %s40
    $region7: #{posterior_encoder_forward.1} parent=1 // loop_footer_branch
      %39 = sbr.rel target = $region3
    $region8: #{posterior_encoder_forward.1} parent=1 // loop_exit
      _
    %2602 = vsyncpa [#allocation5], 1
    %s2603 = scalar_lea.sflag [#allocation5], 1
    %2604 = vsyncpa %s2603, 1
    %2605 = vsyncpa [#allocation8], 1
    %s2606 = scalar_lea.sflag [#allocation8], 1
    %2607 = vsyncpa %s2606, 1
    %2608 = vsyncpa [#allocation11], 1
    %2609 = vsyncpa [#allocation14], 1
    %2610 = vsyncpa [#allocation17], 1
    %2611 = vsyncpa [#allocation20], 1
    %2612 = vsyncpa [#allocation6], 1
    %s2613 = scalar_lea.sflag [#allocation6], 1
    %2614 = vsyncpa %s2613, 1
    %2615 = vsyncpa [#allocation23], 1
    %s2616 = scalar_lea.sflag [#allocation23], 1
    %2617 = vsyncpa %s2616, 1

</llo_original>
